<compile_context>
chip_gen: v7x
topology: tpu7x:2x2x1
jax: 0.10.0
libtpu: 0.0.40
codegen_flags: <defaults>
</compile_context>

<pallas_src>
import jax
import jax.numpy as jnp
import numpy as np
from jax.experimental import pallas as pl
from jax.experimental.pallas import tpu as pltpu

LAYERS = [1, 50, 100, 100, 200, 100, 100, 50, 1]
NUM_LAYERS = len(LAYERS) - 1  # 8 linear layers
# Per-layer padded feature widths. First/last stay at 1 (handled on VPU/XLU).
PADW = [1, 128, 128, 128, 256, 128, 128, 128, 1]


def _round_up(a, m):
    return ((a + m - 1) // m) * m


# ----------------------------- Pallas kernel --------------------------------
def fcn_mlp_kernel(x_ref, *refs):
    """Whole 8-layer MLP forward for one (1, tile_m) batch tile.

    Activations are kept transposed: a has shape (features_padded, tile_m) so
    the batch dimension is lane-major throughout and the output write is a
    lane-dense (1, tile_m) row.

    refs = (w0, b0, w1, b1, ..., w7, b7, o_ref)
      w0: (128, 1)   layer-0 weight column (1 -> 50, padded)  -> VPU rank-1
      wi: (Np, Kp)   layers 1..6, zero-padded W_i              -> MXU matmuls
      w7: (128, 1)   layer-7 weight column (50 -> 1, padded)   -> VPU + reduce
      bi: (Np, 1)    zero-padded bias columns; b7 is (1, 1)
      o_ref: (1, tile_m)
    """
    o_ref = refs[-1]
    p = refs[:-1]  # 16 parameter refs

    x = x_ref[...]                                     # (1, TM)

    # Layer 0 (1 -> 50): rank-1 broadcast on the VPU (fan_in == 1, no MXU).
    a = jnp.tanh(p[0][...] * x + p[1][...])            # (128, TM)

    # Layers 1..6: MXU matmuls at per-layer padded widths (128 / 256).
    for i in range(1, NUM_LAYERS - 1):
        w = p[2 * i][...]                              # (Np_i, Kp_i)
        b = p[2 * i + 1][...]                          # (Np_i, 1)
        a = jnp.tanh(jnp.dot(w, a, preferred_element_type=jnp.float32) + b)

    # Layer 7 (50 -> 1): broadcast multiply + cross-sublane reduce, no tanh.
    w7 = p[2 * (NUM_LAYERS - 1)][...]                  # (128, 1)
    b7 = p[2 * (NUM_LAYERS - 1) + 1][...]              # (1, 1)
    o_ref[...] = jnp.sum(a * w7, axis=0, keepdims=True) + b7   # (1, TM)


def fcn_forward_pallas(x, flat_params, *, tile_m=256):
    """x: (N, 1) float32 -> (N, 1) float32."""
    N = x.shape[0]
    tm = min(tile_m, _round_up(N, 128))    # lane-dim tile; small batches -> 1 step
    n_pad = _round_up(N, tm)               # ragged batches -> pad, slice back

    # (N, 1) -> (1, N) is a pure reshape of contiguous data (no copy).
    x_row = x.astype(jnp.float32).reshape(1, N)
    if n_pad != N:
        x_row = jnp.zeros((1, n_pad), jnp.float32).at[:, :N].set(x_row)

    param_specs = [pl.BlockSpec(p.shape, lambda i: (0, 0)) for p in flat_params]

    out = pl.pallas_call(
        fcn_mlp_kernel,
        out_shape=jax.ShapeDtypeStruct((1, n_pad), jnp.float32),
        grid_spec=pltpu.PrefetchScalarGridSpec(
            num_scalar_prefetch=0,
            grid=(n_pad // tm,),
            in_specs=[pl.BlockSpec((1, tm), lambda i: (0, i))] + param_specs,
            out_specs=pl.BlockSpec((1, tm), lambda i: (0, i)),
        ),
        compiler_params=pltpu.CompilerParams(
            dimension_semantics=("parallel",),   # shards batch tiles across TCs
        ),
    )(x_row, *flat_params)

    # (1, n_pad) -> (n_pad, 1) is again a free reshape; slice off padding.
    return out.reshape(n_pad, 1)[:N]


# --------------------------- parameter construction -------------------------
def init_params(key):
    """Xavier-normal weights (gain=1.0), zero biases, matching nn.Linear init.

    Returns:
      flat: tuple (w0, b0, ..., w7, b7) of zero-padded, kernel-ready operands
            laid out for the transposed (features, batch) activation layout.
      raw:  list of (W, b) at true nn.Linear shapes, for the pure-JAX reference.
    """
    keys = jax.random.split(key, NUM_LAYERS)
    raw, flat = [], []
    for i in range(NUM_LAYERS):
        fan_in, fan_out = LAYERS[i], LAYERS[i + 1]
        std = float(np.sqrt(2.0 / (fan_in + fan_out)))  # xavier_normal_, gain=1.0
        W = std * jax.random.normal(keys[i], (fan_out, fan_in), jnp.float32)
        b = jnp.zeros((fan_out,), jnp.float32)
        raw.append((W, b))

        kp, npad = PADW[i], PADW[i + 1]
        if i == 0:
            # (50, 1) -> column (128, 1): a = tanh(w0 * x_row + b0)
            w_pad = np.zeros((npad, 1), np.float32)
            w_pad[:fan_out, 0] = np.asarray(W)[:, 0]
            b_pad = np.zeros((npad, 1), np.float32)
            b_pad[:fan_out, 0] = np.asarray(b)
        elif i == NUM_LAYERS - 1:
            # (1, 50) -> column (128, 1): out = sum(a * w7, axis=0) + b7
            w_pad = np.zeros((kp, 1), np.float32)
            w_pad[:fan_in, 0] = np.asarray(W)[0, :]
            b_pad = np.zeros((1, 1), np.float32)
            b_pad[0, 0] = float(np.asarray(b)[0])
        else:
            # W zero-padded to (npad, kp) so the kernel does W_pad @ a + b.
            w_pad = np.zeros((npad, kp), np.float32)
            w_pad[:fan_out, :fan_in] = np.asarray(W)
            b_pad = np.zeros((npad, 1), np.float32)
            b_pad[:fan_out, 0] = np.asarray(b)
        flat.append(jnp.asarray(w_pad))
        flat.append(jnp.asarray(b_pad))
    return tuple(flat), raw


def fcn_forward_ref(x, raw_params):
    """Pure-JAX reference mirroring the PyTorch forward exactly."""
    a = x.astype(jnp.float32)
    for i in range(NUM_LAYERS - 1):
        W, b = raw_params[i]
        a = jnp.tanh(a @ W.T + b)
    W, b = raw_params[-1]
    return a @ W.T + b


# TODO(synk): lossBC / lossPDE (autograd.grad + MSE) are training-time host-side
# ops; only the forward pass is implemented as a Pallas kernel.

# ------------------------------------ main -----------------------------------
if __name__ == "__main__":
    key = jax.random.PRNGKey(0)
    k_param, k_x = jax.random.split(key)

    flat_params, raw_params = init_params(k_param)

    N = 512  # batch of 1-D collocation points, x shape (N, 1)
    x = jax.random.uniform(k_x, (N, 1), jnp.float32, minval=0.0, maxval=5.0)

    out = fcn_forward_pallas(x, flat_params, tile_m=256)
    out = jax.block_until_ready(out)

    ref = fcn_forward_ref(x, raw_params)
    assert out.shape == (N, 1)
    np.testing.assert_allclose(np.asarray(out), np.asarray(ref), rtol=1e-4, atol=1e-5)

    print("KERNEL_OK")
</pallas_src>

<mosaic_0001>
module attributes {stable_mosaic.version = 11 : i64} {
  func.func @fcn_mlp_kernel(%arg0: i32, %arg1: memref<1x256xf32, #tpu.memory_space<vmem>>, %arg2: memref<128x1xf32, #tpu.memory_space<vmem>>, %arg3: memref<128x1xf32, #tpu.memory_space<vmem>>, %arg4: memref<128x128xf32, #tpu.memory_space<vmem>>, %arg5: memref<128x1xf32, #tpu.memory_space<vmem>>, %arg6: memref<128x128xf32, #tpu.memory_space<vmem>>, %arg7: memref<128x1xf32, #tpu.memory_space<vmem>>, %arg8: memref<256x128xf32, #tpu.memory_space<vmem>>, %arg9: memref<256x1xf32, #tpu.memory_space<vmem>>, %arg10: memref<128x256xf32, #tpu.memory_space<vmem>>, %arg11: memref<128x1xf32, #tpu.memory_space<vmem>>, %arg12: memref<128x128xf32, #tpu.memory_space<vmem>>, %arg13: memref<128x1xf32, #tpu.memory_space<vmem>>, %arg14: memref<128x128xf32, #tpu.memory_space<vmem>>, %arg15: memref<128x1xf32, #tpu.memory_space<vmem>>, %arg16: memref<128x1xf32, #tpu.memory_space<vmem>>, %arg17: memref<1x1xf32, #tpu.memory_space<vmem>>, %arg18: memref<1x256xf32, #tpu.memory_space<vmem>>) attributes {dimension_semantics = [#tpu.dimension_semantics<parallel>], iteration_bounds = array<i64: 2>, scalar_prefetch = 0 : i64, scratch_operands = 0 : i64, tpu.core_type = #tpu.core_type<tc>, window_params = [{transform_indices = @transform_0, window_bounds = array<i64: 1, 256>}, {pipeline_mode = #tpu.pipeline_mode<synchronous>, transform_indices = @transform_1, window_bounds = array<i64: 128, 1>}, {pipeline_mode = #tpu.pipeline_mode<synchronous>, transform_indices = @transform_2, window_bounds = array<i64: 128, 1>}, {pipeline_mode = #tpu.pipeline_mode<synchronous>, transform_indices = @transform_3, window_bounds = array<i64: 128, 128>}, {pipeline_mode = #tpu.pipeline_mode<synchronous>, transform_indices = @transform_4, window_bounds = array<i64: 128, 1>}, {pipeline_mode = #tpu.pipeline_mode<synchronous>, transform_indices = @transform_5, window_bounds = array<i64: 128, 128>}, {pipeline_mode = #tpu.pipeline_mode<synchronous>, transform_indices = @transform_6, window_bounds = array<i64: 128, 1>}, {pipeline_mode = #tpu.pipeline_mode<synchronous>, transform_indices = @transform_7, window_bounds = array<i64: 256, 128>}, {pipeline_mode = #tpu.pipeline_mode<synchronous>, transform_indices = @transform_8, window_bounds = array<i64: 256, 1>}, {pipeline_mode = #tpu.pipeline_mode<synchronous>, transform_indices = @transform_9, window_bounds = array<i64: 128, 256>}, {pipeline_mode = #tpu.pipeline_mode<synchronous>, transform_indices = @transform_10, window_bounds = array<i64: 128, 1>}, {pipeline_mode = #tpu.pipeline_mode<synchronous>, transform_indices = @transform_11, window_bounds = array<i64: 128, 128>}, {pipeline_mode = #tpu.pipeline_mode<synchronous>, transform_indices = @transform_12, window_bounds = array<i64: 128, 1>}, {pipeline_mode = #tpu.pipeline_mode<synchronous>, transform_indices = @transform_13, window_bounds = array<i64: 128, 128>}, {pipeline_mode = #tpu.pipeline_mode<synchronous>, transform_indices = @transform_14, window_bounds = array<i64: 128, 1>}, {pipeline_mode = #tpu.pipeline_mode<synchronous>, transform_indices = @transform_15, window_bounds = array<i64: 128, 1>}, {pipeline_mode = #tpu.pipeline_mode<synchronous>, transform_indices = @transform_16, window_bounds = array<i64: 1, 1>}, {transform_indices = @transform_17, window_bounds = array<i64: 1, 256>}]} {
    %c0 = arith.constant 0 : index
    %c0_0 = arith.constant 0 : index
    %0 = vector.load %arg1[%c0, %c0_0] : memref<1x256xf32, #tpu.memory_space<vmem>>, vector<1x256xf32>
    %c0_1 = arith.constant 0 : index
    %c0_2 = arith.constant 0 : index
    %1 = vector.load %arg2[%c0_1, %c0_2] : memref<128x1xf32, #tpu.memory_space<vmem>>, vector<128x1xf32>
    %2 = vector.broadcast %1 : vector<128x1xf32> to vector<128x256xf32>
    %3 = vector.broadcast %0 : vector<1x256xf32> to vector<128x256xf32>
    %4 = arith.mulf %2, %3 : vector<128x256xf32>
    %c0_3 = arith.constant 0 : index
    %c0_4 = arith.constant 0 : index
    %5 = vector.load %arg3[%c0_3, %c0_4] : memref<128x1xf32, #tpu.memory_space<vmem>>, vector<128x1xf32>
    %6 = vector.broadcast %5 : vector<128x1xf32> to vector<128x256xf32>
    %7 = arith.addf %4, %6 : vector<128x256xf32>
    %8 = math.tanh %7 : vector<128x256xf32>
    %c0_5 = arith.constant 0 : index
    %c0_6 = arith.constant 0 : index
    %9 = vector.load %arg4[%c0_5, %c0_6] : memref<128x128xf32, #tpu.memory_space<vmem>>, vector<128x128xf32>
    %c0_7 = arith.constant 0 : index
    %c0_8 = arith.constant 0 : index
    %10 = vector.load %arg5[%c0_7, %c0_8] : memref<128x1xf32, #tpu.memory_space<vmem>>, vector<128x1xf32>
    %cst = arith.constant dense<0.000000e+00> : vector<128x256xf32>
    %11 = tpu.matmul %9, %8, %cst {dimension_numbers = #tpu.dot_dimension_numbers<[1], [0], [0], [1], [0, 0, 1, 1], [], []>} : vector<128x128xf32>, vector<128x256xf32>, vector<128x256xf32> -> vector<128x256xf32>
    %12 = vector.broadcast %10 : vector<128x1xf32> to vector<128x256xf32>
    %13 = arith.addf %11, %12 : vector<128x256xf32>
    %14 = math.tanh %13 : vector<128x256xf32>
    %c0_9 = arith.constant 0 : index
    %c0_10 = arith.constant 0 : index
    %15 = vector.load %arg6[%c0_9, %c0_10] : memref<128x128xf32, #tpu.memory_space<vmem>>, vector<128x128xf32>
    %c0_11 = arith.constant 0 : index
    %c0_12 = arith.constant 0 : index
    %16 = vector.load %arg7[%c0_11, %c0_12] : memref<128x1xf32, #tpu.memory_space<vmem>>, vector<128x1xf32>
    %cst_13 = arith.constant dense<0.000000e+00> : vector<128x256xf32>
    %17 = tpu.matmul %15, %14, %cst_13 {dimension_numbers = #tpu.dot_dimension_numbers<[1], [0], [0], [1], [0, 0, 1, 1], [], []>} : vector<128x128xf32>, vector<128x256xf32>, vector<128x256xf32> -> vector<128x256xf32>
    %18 = vector.broadcast %16 : vector<128x1xf32> to vector<128x256xf32>
    %19 = arith.addf %17, %18 : vector<128x256xf32>
    %20 = math.tanh %19 : vector<128x256xf32>
    %c0_14 = arith.constant 0 : index
    %c0_15 = arith.constant 0 : index
    %21 = vector.load %arg8[%c0_14, %c0_15] : memref<256x128xf32, #tpu.memory_space<vmem>>, vector<256x128xf32>
    %c0_16 = arith.constant 0 : index
    %c0_17 = arith.constant 0 : index
    %22 = vector.load %arg9[%c0_16, %c0_17] : memref<256x1xf32, #tpu.memory_space<vmem>>, vector<256x1xf32>
    %cst_18 = arith.constant dense<0.000000e+00> : vector<256x256xf32>
    %23 = tpu.matmul %21, %20, %cst_18 {dimension_numbers = #tpu.dot_dimension_numbers<[1], [0], [0], [1], [0, 0, 1, 1], [], []>} : vector<256x128xf32>, vector<128x256xf32>, vector<256x256xf32> -> vector<256x256xf32>
    %24 = vector.broadcast %22 : vector<256x1xf32> to vector<256x256xf32>
    %25 = arith.addf %23, %24 : vector<256x256xf32>
    %26 = math.tanh %25 : vector<256x256xf32>
    %c0_19 = arith.constant 0 : index
    %c0_20 = arith.constant 0 : index
    %27 = vector.load %arg10[%c0_19, %c0_20] : memref<128x256xf32, #tpu.memory_space<vmem>>, vector<128x256xf32>
    %c0_21 = arith.constant 0 : index
    %c0_22 = arith.constant 0 : index
    %28 = vector.load %arg11[%c0_21, %c0_22] : memref<128x1xf32, #tpu.memory_space<vmem>>, vector<128x1xf32>
    %cst_23 = arith.constant dense<0.000000e+00> : vector<128x256xf32>
    %29 = tpu.matmul %27, %26, %cst_23 {dimension_numbers = #tpu.dot_dimension_numbers<[1], [0], [0], [1], [0, 0, 1, 1], [], []>} : vector<128x256xf32>, vector<256x256xf32>, vector<128x256xf32> -> vector<128x256xf32>
    %30 = vector.broadcast %28 : vector<128x1xf32> to vector<128x256xf32>
    %31 = arith.addf %29, %30 : vector<128x256xf32>
    %32 = math.tanh %31 : vector<128x256xf32>
    %c0_24 = arith.constant 0 : index
    %c0_25 = arith.constant 0 : index
    %33 = vector.load %arg12[%c0_24, %c0_25] : memref<128x128xf32, #tpu.memory_space<vmem>>, vector<128x128xf32>
    %c0_26 = arith.constant 0 : index
    %c0_27 = arith.constant 0 : index
    %34 = vector.load %arg13[%c0_26, %c0_27] : memref<128x1xf32, #tpu.memory_space<vmem>>, vector<128x1xf32>
    %cst_28 = arith.constant dense<0.000000e+00> : vector<128x256xf32>
    %35 = tpu.matmul %33, %32, %cst_28 {dimension_numbers = #tpu.dot_dimension_numbers<[1], [0], [0], [1], [0, 0, 1, 1], [], []>} : vector<128x128xf32>, vector<128x256xf32>, vector<128x256xf32> -> vector<128x256xf32>
    %36 = vector.broadcast %34 : vector<128x1xf32> to vector<128x256xf32>
    %37 = arith.addf %35, %36 : vector<128x256xf32>
    %38 = math.tanh %37 : vector<128x256xf32>
    %c0_29 = arith.constant 0 : index
    %c0_30 = arith.constant 0 : index
    %39 = vector.load %arg14[%c0_29, %c0_30] : memref<128x128xf32, #tpu.memory_space<vmem>>, vector<128x128xf32>
    %c0_31 = arith.constant 0 : index
    %c0_32 = arith.constant 0 : index
    %40 = vector.load %arg15[%c0_31, %c0_32] : memref<128x1xf32, #tpu.memory_space<vmem>>, vector<128x1xf32>
    %cst_33 = arith.constant dense<0.000000e+00> : vector<128x256xf32>
    %41 = tpu.matmul %39, %38, %cst_33 {dimension_numbers = #tpu.dot_dimension_numbers<[1], [0], [0], [1], [0, 0, 1, 1], [], []>} : vector<128x128xf32>, vector<128x256xf32>, vector<128x256xf32> -> vector<128x256xf32>
    %42 = vector.broadcast %40 : vector<128x1xf32> to vector<128x256xf32>
    %43 = arith.addf %41, %42 : vector<128x256xf32>
    %44 = math.tanh %43 : vector<128x256xf32>
    %c0_34 = arith.constant 0 : index
    %c0_35 = arith.constant 0 : index
    %45 = vector.load %arg16[%c0_34, %c0_35] : memref<128x1xf32, #tpu.memory_space<vmem>>, vector<128x1xf32>
    %c0_36 = arith.constant 0 : index
    %c0_37 = arith.constant 0 : index
    %46 = vector.load %arg17[%c0_36, %c0_37] : memref<1x1xf32, #tpu.memory_space<vmem>>, vector<1x1xf32>
    %47 = vector.broadcast %45 : vector<128x1xf32> to vector<128x256xf32>
    %48 = arith.mulf %44, %47 : vector<128x256xf32>
    %cst_38 = arith.constant dense<0.000000e+00> : vector<256xf32>
    %49 = vector.multi_reduction <add>, %48, %cst_38 [0] : vector<128x256xf32> to vector<256xf32>
    %50 = vector.shape_cast %49 : vector<256xf32> to vector<1x256xf32>
    %51 = vector.broadcast %46 : vector<1x1xf32> to vector<1x256xf32>
    %52 = arith.addf %50, %51 : vector<1x256xf32>
    %c0_39 = arith.constant 0 : index
    %c0_40 = arith.constant 0 : index
    %53 = vector.load %arg18[%c0_39, %c0_40] : memref<1x256xf32, #tpu.memory_space<vmem>>, vector<1x256xf32>
    tpu.vector_store %arg18[%c0_39, %c0_40], %52 {strides = array<i32>} : memref<1x256xf32, #tpu.memory_space<vmem>>, vector<1x256xf32>,
    return
  }
  func.func @transform_0(%arg0: i32) -> (i32, i32) {
    %c0_i32 = arith.constant 0 : i32
    %c0_i32_0 = arith.constant 0 : i32
    return %c0_i32, %arg0 : i32, i32
  }
  func.func @transform_1(%arg0: i32) -> (i32, i32) {
    %c0_i32 = arith.constant 0 : i32
    %c0_i32_0 = arith.constant 0 : i32
    %c0_i32_1 = arith.constant 0 : i32
    return %c0_i32, %c0_i32_0 : i32, i32
  }
  func.func @transform_2(%arg0: i32) -> (i32, i32) {
    %c0_i32 = arith.constant 0 : i32
    %c0_i32_0 = arith.constant 0 : i32
    %c0_i32_1 = arith.constant 0 : i32
    return %c0_i32, %c0_i32_0 : i32, i32
  }
  func.func @transform_3(%arg0: i32) -> (i32, i32) {
    %c0_i32 = arith.constant 0 : i32
    %c0_i32_0 = arith.constant 0 : i32
    %c0_i32_1 = arith.constant 0 : i32
    return %c0_i32, %c0_i32_0 : i32, i32
  }
  func.func @transform_4(%arg0: i32) -> (i32, i32) {
    %c0_i32 = arith.constant 0 : i32
    %c0_i32_0 = arith.constant 0 : i32
    %c0_i32_1 = arith.constant 0 : i32
    return %c0_i32, %c0_i32_0 : i32, i32
  }
  func.func @transform_5(%arg0: i32) -> (i32, i32) {
    %c0_i32 = arith.constant 0 : i32
    %c0_i32_0 = arith.constant 0 : i32
    %c0_i32_1 = arith.constant 0 : i32
    return %c0_i32, %c0_i32_0 : i32, i32
  }
  func.func @transform_6(%arg0: i32) -> (i32, i32) {
    %c0_i32 = arith.constant 0 : i32
    %c0_i32_0 = arith.constant 0 : i32
    %c0_i32_1 = arith.constant 0 : i32
    return %c0_i32, %c0_i32_0 : i32, i32
  }
  func.func @transform_7(%arg0: i32) -> (i32, i32) {
    %c0_i32 = arith.constant 0 : i32
    %c0_i32_0 = arith.constant 0 : i32
    %c0_i32_1 = arith.constant 0 : i32
    return %c0_i32, %c0_i32_0 : i32, i32
  }
  func.func @transform_8(%arg0: i32) -> (i32, i32) {
    %c0_i32 = arith.constant 0 : i32
    %c0_i32_0 = arith.constant 0 : i32
    %c0_i32_1 = arith.constant 0 : i32
    return %c0_i32, %c0_i32_0 : i32, i32
  }
  func.func @transform_9(%arg0: i32) -> (i32, i32) {
    %c0_i32 = arith.constant 0 : i32
    %c0_i32_0 = arith.constant 0 : i32
    %c0_i32_1 = arith.constant 0 : i32
    return %c0_i32, %c0_i32_0 : i32, i32
  }
  func.func @transform_10(%arg0: i32) -> (i32, i32) {
    %c0_i32 = arith.constant 0 : i32
    %c0_i32_0 = arith.constant 0 : i32
    %c0_i32_1 = arith.constant 0 : i32
    return %c0_i32, %c0_i32_0 : i32, i32
  }
  func.func @transform_11(%arg0: i32) -> (i32, i32) {
    %c0_i32 = arith.constant 0 : i32
    %c0_i32_0 = arith.constant 0 : i32
    %c0_i32_1 = arith.constant 0 : i32
    return %c0_i32, %c0_i32_0 : i32, i32
  }
  func.func @transform_12(%arg0: i32) -> (i32, i32) {
    %c0_i32 = arith.constant 0 : i32
    %c0_i32_0 = arith.constant 0 : i32
    %c0_i32_1 = arith.constant 0 : i32
    return %c0_i32, %c0_i32_0 : i32, i32
  }
  func.func @transform_13(%arg0: i32) -> (i32, i32) {
    %c0_i32 = arith.constant 0 : i32
    %c0_i32_0 = arith.constant 0 : i32
    %c0_i32_1 = arith.constant 0 : i32
    return %c0_i32, %c0_i32_0 : i32, i32
  }
  func.func @transform_14(%arg0: i32) -> (i32, i32) {
    %c0_i32 = arith.constant 0 : i32
    %c0_i32_0 = arith.constant 0 : i32
    %c0_i32_1 = arith.constant 0 : i32
    return %c0_i32, %c0_i32_0 : i32, i32
  }
  func.func @transform_15(%arg0: i32) -> (i32, i32) {
    %c0_i32 = arith.constant 0 : i32
    %c0_i32_0 = arith.constant 0 : i32
    %c0_i32_1 = arith.constant 0 : i32
    return %c0_i32, %c0_i32_0 : i32, i32
  }
  func.func @transform_16(%arg0: i32) -> (i32, i32) {
    %c0_i32 = arith.constant 0 : i32
    %c0_i32_0 = arith.constant 0 : i32
    %c0_i32_1 = arith.constant 0 : i32
    return %c0_i32, %c0_i32_0 : i32, i32
  }
  func.func @transform_17(%arg0: i32) -> (i32, i32) {
    %c0_i32 = arith.constant 0 : i32
    %c0_i32_0 = arith.constant 0 : i32
    return %c0_i32, %arg0 : i32, i32
  }
}

</mosaic_0001>

<llo_original>
// kernel: tpu_custom_call.1
$region0: #{tpu_custom_call.1}
  #allocation0 [shape = 'u32[]', space=smem, size = 0x4, offset = 0x4, fixed_abs, tag = 'smem constant byte address 0x4 - core index']
  #allocation1 [shape = 'u32[144,128]{1,0:T(1,128)}', space=vmem, size = 0x12000, scoped, tag = 'internal scratch']
  #allocation2 [shape = 'f32[1,1]{1,0:T(1,128)S(1)}', space=vmem, size = 0x200, scoped, tag = 'scoped memory for tpu_custom_call.1']
  %s0 = inlined_call_operand.vmem [shape: f32[1,512], index: 0, kind: input, shape index: {}]
  %s1 = inlined_call_operand.vmem [shape: f32[128,1], index: 1, kind: input, shape index: {}]
  %s2 = inlined_call_operand.vmem [shape: f32[128,1], index: 2, kind: input, shape index: {}]
  %s3 = inlined_call_operand.vmem [shape: f32[128,128], index: 3, kind: input, shape index: {}]
  %s4 = inlined_call_operand.vmem [shape: f32[128,1], index: 4, kind: input, shape index: {}]
  %s5 = inlined_call_operand.vmem [shape: f32[128,128], index: 5, kind: input, shape index: {}]
  %s6 = inlined_call_operand.vmem [shape: f32[128,1], index: 6, kind: input, shape index: {}]
  %s7 = inlined_call_operand.vmem [shape: f32[256,128], index: 7, kind: input, shape index: {}]
  %s8 = inlined_call_operand.vmem [shape: f32[256,1], index: 8, kind: input, shape index: {}]
  %s9 = inlined_call_operand.vmem [shape: f32[128,256], index: 9, kind: input, shape index: {}]
  %s10 = inlined_call_operand.vmem [shape: f32[128,1], index: 10, kind: input, shape index: {}]
  %s11 = inlined_call_operand.vmem [shape: f32[128,128], index: 11, kind: input, shape index: {}]
  %s12 = inlined_call_operand.vmem [shape: f32[128,1], index: 12, kind: input, shape index: {}]
  %s13 = inlined_call_operand.vmem [shape: f32[128,128], index: 13, kind: input, shape index: {}]
  %s14 = inlined_call_operand.vmem [shape: f32[128,1], index: 14, kind: input, shape index: {}]
  %s15 = inlined_call_operand.vmem [shape: f32[128,1], index: 15, kind: input, shape index: {}]
  %s16 = inlined_call_operand.<no memory space> [shape: f32[1,1], index: 16, kind: input, shape index: {}]
  %s17 = inlined_call_operand.hbm [shape: f32[1,512], index: 17, kind: output, shape index: {}]
  %s18 = sld [smem:[#allocation0]]
  $region101: #{tpu_custom_call.1} parent=0
    _
  %s20 = ssub.s32 1, %s18
  %s21 = scalar_select 0, %s20, %s18
  %v22 = vstv %s16
  %23 = vst [vmem:[#allocation2] sm:$0x1] %v22
  $region1: #{tpu_custom_call.1} parent=0
    #allocation3 [shape = 'u8[2048]{0}', space=vmem, size = 0x800, scoped, tag = 'output window, operand 0']
    #allocation4 [shape = 's32[2]{0}', space=sflag, size = 0x8, scoped, tag = 'scoped memory for tpu_custom_call.1']
    %24 = vsyncpa [#allocation4], 0
    %s25 = scalar_lea.sflag [#allocation4], 1
    %26 = vsyncpa %s25, 0
    loop: start=0, step=1, limit=4
    $region2: #{tpu_custom_call.1} parent=1 // loop_pre_header
      _
    $region3: #{tpu_custom_call.1} parent=1 // loop_header
      %s28 = sphi 0, %s32
      %p29 = scmp.ge.s32.totalorder %s28, 4
      %s38 = sphi 0, %s40
      %s41 = sphi 0, %s38
      %s42 = sphi 0, %s41
      %s58 = sphi 0, %s42
      %s62 = sphi 0, %s62
      %s64 = sphi 0, %s62
      %s65 = sphi 0, %s64
      %s79 = sphi 0, %s65
      %s83 = sphi 0, %s83
      %s85 = sphi 0, %s83
      %s86 = sphi 0, %s85
      %s100 = sphi 0, %s86
      %s104 = sphi 0, %s104
      %s106 = sphi 0, %s104
      %s107 = sphi 0, %s106
      %s121 = sphi 0, %s107
      %s125 = sphi 0, %s125
      %s127 = sphi 0, %s125
      %s128 = sphi 0, %s127
      %s142 = sphi 0, %s128
      %s146 = sphi 0, %s146
      %s148 = sphi 0, %s146
      %s149 = sphi 0, %s148
      %s163 = sphi 0, %s149
      %s167 = sphi 0, %s167
      %s169 = sphi 0, %s167
      %s170 = sphi 0, %s169
      %s184 = sphi 0, %s170
      %s188 = sphi 0, %s188
      %s190 = sphi 0, %s188
      %s191 = sphi 0, %s190
      %s205 = sphi 0, %s191
      %s209 = sphi 0, %s209
      %s211 = sphi 0, %s209
      %s212 = sphi 0, %s211
      %s226 = sphi 0, %s212
      %s230 = sphi 0, %s230
      %s232 = sphi 0, %s230
      %s233 = sphi 0, %s232
      %s247 = sphi 0, %s233
      %s251 = sphi 0, %s251
      %s253 = sphi 0, %s251
      %s254 = sphi 0, %s253
      %s268 = sphi 0, %s254
      %s272 = sphi 0, %s272
      %s274 = sphi 0, %s272
      %s275 = sphi 0, %s274
      %s289 = sphi 0, %s275
      %s293 = sphi 0, %s293
      %s295 = sphi 0, %s293
      %s296 = sphi 0, %s295
      %s310 = sphi 0, %s296
      %s314 = sphi 0, %s314
      %s316 = sphi 0, %s314
      %s317 = sphi 0, %s316
      %s331 = sphi 0, %s317
      %s335 = sphi 0, %s335
      %s337 = sphi 0, %s335
      %s338 = sphi 0, %s337
      %s352 = sphi 0, %s338
      %s356 = sphi 0, %s356
      %s358 = sphi 0, %s356
      %s359 = sphi 0, %s358
      %s373 = sphi 0, %s359
      %s377 = sphi 0, %s377
      %s379 = sphi 0, %s377
      %s380 = sphi 0, %s379
      %s394 = sphi 0, %s380
      %s400 = sphi 0, %s402
      %s403 = sphi 0, %s400
      %s404 = sphi 0, %s403
      %s420 = sphi 0, %s404
    $region4: #{tpu_custom_call.1} parent=1 // loop_header_branch
      %31 = sbr.rel (%p29) target = $region8
    $region5: #{tpu_custom_call.1} parent=1 // loop_body
      %s33 = ssub.s32 %s28, 1
      %s34 = ssub.s32 %s28, 2
      %s35 = sadd.s32 %s28, 1
      %s36 = ssub.s32 %s28, %s35
      %p37 = scmp.eq.s32.totalorder %s36, 0
      %s39 = sadd.s32 %s38, 1
      %s40 = scalar_select %p37, %s38, %s39
      %p43 = pneg %p37
      %p44 = scmp.eq.s32.totalorder %s28, 1
      %p45 = por %p43, %p44
      %p46 = scmp.ne.s32.totalorder %s38, %s41
      %p47 = scmp.eq.s32.totalorder %s28, 0
      %p48 = por %p46, %p47
      %p49 = scmp.ne.s32.totalorder %s38, %s41
      %p50 = scmp.eq.s32.totalorder %s33, 1
      %p51 = por %p49, %p50
      %p52 = scmp.ne.s32.totalorder %s41, %s42
      %p53 = scmp.eq.s32.totalorder %s33, 0
      %p54 = por %p52, %p53
      %p55 = scmp.ne.s32.totalorder %s41, %s42
      %p56 = scmp.eq.s32.totalorder %s34, 1
      %p57 = por %p55, %p56
      %p59 = scmp.ne.s32.totalorder %s42, %s58
      %p60 = scmp.eq.s32.totalorder %s34, 0
      %p61 = por %p59, %p60
      %s63 = sadd.s32 %s62, 1
      %p66 = scmp.eq.s32.totalorder %s28, 1
      %p67 = scmp.ne.s32.totalorder %s62, %s64
      %p68 = scmp.eq.s32.totalorder %s28, 0
      %p69 = por %p67, %p68
      %p70 = scmp.ne.s32.totalorder %s62, %s64
      %p71 = scmp.eq.s32.totalorder %s33, 1
      %p72 = por %p70, %p71
      %p73 = scmp.ne.s32.totalorder %s64, %s65
      %p74 = scmp.eq.s32.totalorder %s33, 0
      %p75 = por %p73, %p74
      %p76 = scmp.ne.s32.totalorder %s64, %s65
      %p77 = scmp.eq.s32.totalorder %s34, 1
      %p78 = por %p76, %p77
      %p80 = scmp.ne.s32.totalorder %s65, %s79
      %p81 = scmp.eq.s32.totalorder %s34, 0
      %p82 = por %p80, %p81
      %s84 = sadd.s32 %s83, 1
      %p87 = scmp.eq.s32.totalorder %s28, 1
      %p88 = scmp.ne.s32.totalorder %s83, %s85
      %p89 = scmp.eq.s32.totalorder %s28, 0
      %p90 = por %p88, %p89
      %p91 = scmp.ne.s32.totalorder %s83, %s85
      %p92 = scmp.eq.s32.totalorder %s33, 1
      %p93 = por %p91, %p92
      %p94 = scmp.ne.s32.totalorder %s85, %s86
      %p95 = scmp.eq.s32.totalorder %s33, 0
      %p96 = por %p94, %p95
      %p97 = scmp.ne.s32.totalorder %s85, %s86
      %p98 = scmp.eq.s32.totalorder %s34, 1
      %p99 = por %p97, %p98
      %p101 = scmp.ne.s32.totalorder %s86, %s100
      %p102 = scmp.eq.s32.totalorder %s34, 0
      %p103 = por %p101, %p102
      %s105 = sadd.s32 %s104, 1
      %p108 = scmp.eq.s32.totalorder %s28, 1
      %p109 = scmp.ne.s32.totalorder %s104, %s106
      %p110 = scmp.eq.s32.totalorder %s28, 0
      %p111 = por %p109, %p110
      %p112 = scmp.ne.s32.totalorder %s104, %s106
      %p113 = scmp.eq.s32.totalorder %s33, 1
      %p114 = por %p112, %p113
      %p115 = scmp.ne.s32.totalorder %s106, %s107
      %p116 = scmp.eq.s32.totalorder %s33, 0
      %p117 = por %p115, %p116
      %p118 = scmp.ne.s32.totalorder %s106, %s107
      %p119 = scmp.eq.s32.totalorder %s34, 1
      %p120 = por %p118, %p119
      %p122 = scmp.ne.s32.totalorder %s107, %s121
      %p123 = scmp.eq.s32.totalorder %s34, 0
      %p124 = por %p122, %p123
      %s126 = sadd.s32 %s125, 1
      %p129 = scmp.eq.s32.totalorder %s28, 1
      %p130 = scmp.ne.s32.totalorder %s125, %s127
      %p131 = scmp.eq.s32.totalorder %s28, 0
      %p132 = por %p130, %p131
      %p133 = scmp.ne.s32.totalorder %s125, %s127
      %p134 = scmp.eq.s32.totalorder %s33, 1
      %p135 = por %p133, %p134
      %p136 = scmp.ne.s32.totalorder %s127, %s128
      %p137 = scmp.eq.s32.totalorder %s33, 0
      %p138 = por %p136, %p137
      %p139 = scmp.ne.s32.totalorder %s127, %s128
      %p140 = scmp.eq.s32.totalorder %s34, 1
      %p141 = por %p139, %p140
      %p143 = scmp.ne.s32.totalorder %s128, %s142
      %p144 = scmp.eq.s32.totalorder %s34, 0
      %p145 = por %p143, %p144
      %s147 = sadd.s32 %s146, 1
      %p150 = scmp.eq.s32.totalorder %s28, 1
      %p151 = scmp.ne.s32.totalorder %s146, %s148
      %p152 = scmp.eq.s32.totalorder %s28, 0
      %p153 = por %p151, %p152
      %p154 = scmp.ne.s32.totalorder %s146, %s148
      %p155 = scmp.eq.s32.totalorder %s33, 1
      %p156 = por %p154, %p155
      %p157 = scmp.ne.s32.totalorder %s148, %s149
      %p158 = scmp.eq.s32.totalorder %s33, 0
      %p159 = por %p157, %p158
      %p160 = scmp.ne.s32.totalorder %s148, %s149
      %p161 = scmp.eq.s32.totalorder %s34, 1
      %p162 = por %p160, %p161
      %p164 = scmp.ne.s32.totalorder %s149, %s163
      %p165 = scmp.eq.s32.totalorder %s34, 0
      %p166 = por %p164, %p165
      %s168 = sadd.s32 %s167, 1
      %p171 = scmp.eq.s32.totalorder %s28, 1
      %p172 = scmp.ne.s32.totalorder %s167, %s169
      %p173 = scmp.eq.s32.totalorder %s28, 0
      %p174 = por %p172, %p173
      %p175 = scmp.ne.s32.totalorder %s167, %s169
      %p176 = scmp.eq.s32.totalorder %s33, 1
      %p177 = por %p175, %p176
      %p178 = scmp.ne.s32.totalorder %s169, %s170
      %p179 = scmp.eq.s32.totalorder %s33, 0
      %p180 = por %p178, %p179
      %p181 = scmp.ne.s32.totalorder %s169, %s170
      %p182 = scmp.eq.s32.totalorder %s34, 1
      %p183 = por %p181, %p182
      %p185 = scmp.ne.s32.totalorder %s170, %s184
      %p186 = scmp.eq.s32.totalorder %s34, 0
      %p187 = por %p185, %p186
      %s189 = sadd.s32 %s188, 1
      %p192 = scmp.eq.s32.totalorder %s28, 1
      %p193 = scmp.ne.s32.totalorder %s188, %s190
      %p194 = scmp.eq.s32.totalorder %s28, 0
      %p195 = por %p193, %p194
      %p196 = scmp.ne.s32.totalorder %s188, %s190
      %p197 = scmp.eq.s32.totalorder %s33, 1
      %p198 = por %p196, %p197
      %p199 = scmp.ne.s32.totalorder %s190, %s191
      %p200 = scmp.eq.s32.totalorder %s33, 0
      %p201 = por %p199, %p200
      %p202 = scmp.ne.s32.totalorder %s190, %s191
      %p203 = scmp.eq.s32.totalorder %s34, 1
      %p204 = por %p202, %p203
      %p206 = scmp.ne.s32.totalorder %s191, %s205
      %p207 = scmp.eq.s32.totalorder %s34, 0
      %p208 = por %p206, %p207
      %s210 = sadd.s32 %s209, 1
      %p213 = scmp.eq.s32.totalorder %s28, 1
      %p214 = scmp.ne.s32.totalorder %s209, %s211
      %p215 = scmp.eq.s32.totalorder %s28, 0
      %p216 = por %p214, %p215
      %p217 = scmp.ne.s32.totalorder %s209, %s211
      %p218 = scmp.eq.s32.totalorder %s33, 1
      %p219 = por %p217, %p218
      %p220 = scmp.ne.s32.totalorder %s211, %s212
      %p221 = scmp.eq.s32.totalorder %s33, 0
      %p222 = por %p220, %p221
      %p223 = scmp.ne.s32.totalorder %s211, %s212
      %p224 = scmp.eq.s32.totalorder %s34, 1
      %p225 = por %p223, %p224
      %p227 = scmp.ne.s32.totalorder %s212, %s226
      %p228 = scmp.eq.s32.totalorder %s34, 0
      %p229 = por %p227, %p228
      %s231 = sadd.s32 %s230, 1
      %p234 = scmp.eq.s32.totalorder %s28, 1
      %p235 = scmp.ne.s32.totalorder %s230, %s232
      %p236 = scmp.eq.s32.totalorder %s28, 0
      %p237 = por %p235, %p236
      %p238 = scmp.ne.s32.totalorder %s230, %s232
      %p239 = scmp.eq.s32.totalorder %s33, 1
      %p240 = por %p238, %p239
      %p241 = scmp.ne.s32.totalorder %s232, %s233
      %p242 = scmp.eq.s32.totalorder %s33, 0
      %p243 = por %p241, %p242
      %p244 = scmp.ne.s32.totalorder %s232, %s233
      %p245 = scmp.eq.s32.totalorder %s34, 1
      %p246 = por %p244, %p245
      %p248 = scmp.ne.s32.totalorder %s233, %s247
      %p249 = scmp.eq.s32.totalorder %s34, 0
      %p250 = por %p248, %p249
      %s252 = sadd.s32 %s251, 1
      %p255 = scmp.eq.s32.totalorder %s28, 1
      %p256 = scmp.ne.s32.totalorder %s251, %s253
      %p257 = scmp.eq.s32.totalorder %s28, 0
      %p258 = por %p256, %p257
      %p259 = scmp.ne.s32.totalorder %s251, %s253
      %p260 = scmp.eq.s32.totalorder %s33, 1
      %p261 = por %p259, %p260
      %p262 = scmp.ne.s32.totalorder %s253, %s254
      %p263 = scmp.eq.s32.totalorder %s33, 0
      %p264 = por %p262, %p263
      %p265 = scmp.ne.s32.totalorder %s253, %s254
      %p266 = scmp.eq.s32.totalorder %s34, 1
      %p267 = por %p265, %p266
      %p269 = scmp.ne.s32.totalorder %s254, %s268
      %p270 = scmp.eq.s32.totalorder %s34, 0
      %p271 = por %p269, %p270
      %s273 = sadd.s32 %s272, 1
      %p276 = scmp.eq.s32.totalorder %s28, 1
      %p277 = scmp.ne.s32.totalorder %s272, %s274
      %p278 = scmp.eq.s32.totalorder %s28, 0
      %p279 = por %p277, %p278
      %p280 = scmp.ne.s32.totalorder %s272, %s274
      %p281 = scmp.eq.s32.totalorder %s33, 1
      %p282 = por %p280, %p281
      %p283 = scmp.ne.s32.totalorder %s274, %s275
      %p284 = scmp.eq.s32.totalorder %s33, 0
      %p285 = por %p283, %p284
      %p286 = scmp.ne.s32.totalorder %s274, %s275
      %p287 = scmp.eq.s32.totalorder %s34, 1
      %p288 = por %p286, %p287
      %p290 = scmp.ne.s32.totalorder %s275, %s289
      %p291 = scmp.eq.s32.totalorder %s34, 0
      %p292 = por %p290, %p291
      %s294 = sadd.s32 %s293, 1
      %p297 = scmp.eq.s32.totalorder %s28, 1
      %p298 = scmp.ne.s32.totalorder %s293, %s295
      %p299 = scmp.eq.s32.totalorder %s28, 0
      %p300 = por %p298, %p299
      %p301 = scmp.ne.s32.totalorder %s293, %s295
      %p302 = scmp.eq.s32.totalorder %s33, 1
      %p303 = por %p301, %p302
      %p304 = scmp.ne.s32.totalorder %s295, %s296
      %p305 = scmp.eq.s32.totalorder %s33, 0
      %p306 = por %p304, %p305
      %p307 = scmp.ne.s32.totalorder %s295, %s296
      %p308 = scmp.eq.s32.totalorder %s34, 1
      %p309 = por %p307, %p308
      %p311 = scmp.ne.s32.totalorder %s296, %s310
      %p312 = scmp.eq.s32.totalorder %s34, 0
      %p313 = por %p311, %p312
      %s315 = sadd.s32 %s314, 1
      %p318 = scmp.eq.s32.totalorder %s28, 1
      %p319 = scmp.ne.s32.totalorder %s314, %s316
      %p320 = scmp.eq.s32.totalorder %s28, 0
      %p321 = por %p319, %p320
      %p322 = scmp.ne.s32.totalorder %s314, %s316
      %p323 = scmp.eq.s32.totalorder %s33, 1
      %p324 = por %p322, %p323
      %p325 = scmp.ne.s32.totalorder %s316, %s317
      %p326 = scmp.eq.s32.totalorder %s33, 0
      %p327 = por %p325, %p326
      %p328 = scmp.ne.s32.totalorder %s316, %s317
      %p329 = scmp.eq.s32.totalorder %s34, 1
      %p330 = por %p328, %p329
      %p332 = scmp.ne.s32.totalorder %s317, %s331
      %p333 = scmp.eq.s32.totalorder %s34, 0
      %p334 = por %p332, %p333
      %s336 = sadd.s32 %s335, 1
      %p339 = scmp.eq.s32.totalorder %s28, 1
      %p340 = scmp.ne.s32.totalorder %s335, %s337
      %p341 = scmp.eq.s32.totalorder %s28, 0
      %p342 = por %p340, %p341
      %p343 = scmp.ne.s32.totalorder %s335, %s337
      %p344 = scmp.eq.s32.totalorder %s33, 1
      %p345 = por %p343, %p344
      %p346 = scmp.ne.s32.totalorder %s337, %s338
      %p347 = scmp.eq.s32.totalorder %s33, 0
      %p348 = por %p346, %p347
      %p349 = scmp.ne.s32.totalorder %s337, %s338
      %p350 = scmp.eq.s32.totalorder %s34, 1
      %p351 = por %p349, %p350
      %p353 = scmp.ne.s32.totalorder %s338, %s352
      %p354 = scmp.eq.s32.totalorder %s34, 0
      %p355 = por %p353, %p354
      %s357 = sadd.s32 %s356, 1
      %p360 = scmp.eq.s32.totalorder %s28, 1
      %p361 = scmp.ne.s32.totalorder %s356, %s358
      %p362 = scmp.eq.s32.totalorder %s28, 0
      %p363 = por %p361, %p362
      %p364 = scmp.ne.s32.totalorder %s356, %s358
      %p365 = scmp.eq.s32.totalorder %s33, 1
      %p366 = por %p364, %p365
      %p367 = scmp.ne.s32.totalorder %s358, %s359
      %p368 = scmp.eq.s32.totalorder %s33, 0
      %p369 = por %p367, %p368
      %p370 = scmp.ne.s32.totalorder %s358, %s359
      %p371 = scmp.eq.s32.totalorder %s34, 1
      %p372 = por %p370, %p371
      %p374 = scmp.ne.s32.totalorder %s359, %s373
      %p375 = scmp.eq.s32.totalorder %s34, 0
      %p376 = por %p374, %p375
      %s378 = sadd.s32 %s377, 1
      %p381 = scmp.eq.s32.totalorder %s28, 1
      %p382 = scmp.ne.s32.totalorder %s377, %s379
      %p383 = scmp.eq.s32.totalorder %s28, 0
      %p384 = por %p382, %p383
      %p385 = scmp.ne.s32.totalorder %s377, %s379
      %p386 = scmp.eq.s32.totalorder %s33, 1
      %p387 = por %p385, %p386
      %p388 = scmp.ne.s32.totalorder %s379, %s380
      %p389 = scmp.eq.s32.totalorder %s33, 0
      %p390 = por %p388, %p389
      %p391 = scmp.ne.s32.totalorder %s379, %s380
      %p392 = scmp.eq.s32.totalorder %s34, 1
      %p393 = por %p391, %p392
      %p395 = scmp.ne.s32.totalorder %s380, %s394
      %p396 = scmp.eq.s32.totalorder %s34, 0
      %p397 = por %p395, %p396
      %s398 = ssub.s32 %s28, %s35
      %p399 = scmp.eq.s32.totalorder %s398, 0
      %s401 = sadd.s32 %s400, 1
      %s402 = scalar_select %p399, %s400, %s401
      %p405 = pneg %p399
      %p406 = scmp.eq.s32.totalorder %s28, 1
      %p407 = por %p405, %p406
      %p408 = scmp.ne.s32.totalorder %s400, %s403
      %p409 = scmp.eq.s32.totalorder %s28, 0
      %p410 = por %p408, %p409
      %p411 = scmp.ne.s32.totalorder %s400, %s403
      %p412 = scmp.eq.s32.totalorder %s33, 1
      %p413 = por %p411, %p412
      %p414 = scmp.ne.s32.totalorder %s403, %s404
      %p415 = scmp.eq.s32.totalorder %s33, 0
      %p416 = por %p414, %p415
      %p417 = scmp.ne.s32.totalorder %s403, %s404
      %p418 = scmp.eq.s32.totalorder %s34, 1
      %p419 = por %p417, %p418
      %p421 = scmp.ne.s32.totalorder %s404, %s420
      %p422 = scmp.eq.s32.totalorder %s34, 0
      %p423 = por %p421, %p422
      %p424 = scmp.le.s32.totalorder 1, %s28
      %p425 = scmp.lt.s32.totalorder %s28, 3
      %p426 = pnand %p424, %p425
      %p427 = pneg %p426
      // Predicated region
      $region9: #{tpu_custom_call.1} parent=5 // pred_check
        _
      $region10: #{tpu_custom_call.1} parent=5 // pred_check_branch
        %429 = sbr.rel (%p426) target = $region12
      $region11: #{tpu_custom_call.1} parent=5 // pred_region
        %s430 = ssub.s32 %s28, 1
        // Predicated region
        $region13: #{tpu_custom_call.1} parent=11 // pred_check
          %p431 = pneg %p75
        $region14: #{tpu_custom_call.1} parent=11 // pred_check_branch
          %433 = sbr.rel (%p431) target = $region16
        $region15: #{tpu_custom_call.1} parent=11 // pred_region
          _
        $region16: #{tpu_custom_call.1} parent=11 // pred_fallthru
          _
        // Predicated region
        $region17: #{tpu_custom_call.1} parent=11 // pred_check
          %p434 = pneg %p96
        $region18: #{tpu_custom_call.1} parent=11 // pred_check_branch
          %436 = sbr.rel (%p434) target = $region20
        $region19: #{tpu_custom_call.1} parent=11 // pred_region
          _
        $region20: #{tpu_custom_call.1} parent=11 // pred_fallthru
          _
        // Predicated region
        $region21: #{tpu_custom_call.1} parent=11 // pred_check
          %p437 = pneg %p117
        $region22: #{tpu_custom_call.1} parent=11 // pred_check_branch
          %439 = sbr.rel (%p437) target = $region24
        $region23: #{tpu_custom_call.1} parent=11 // pred_region
          _
        $region24: #{tpu_custom_call.1} parent=11 // pred_fallthru
          _
        // Predicated region
        $region25: #{tpu_custom_call.1} parent=11 // pred_check
          %p440 = pneg %p138
        $region26: #{tpu_custom_call.1} parent=11 // pred_check_branch
          %442 = sbr.rel (%p440) target = $region28
        $region27: #{tpu_custom_call.1} parent=11 // pred_region
          _
        $region28: #{tpu_custom_call.1} parent=11 // pred_fallthru
          _
        // Predicated region
        $region29: #{tpu_custom_call.1} parent=11 // pred_check
          %p443 = pneg %p159
        $region30: #{tpu_custom_call.1} parent=11 // pred_check_branch
          %445 = sbr.rel (%p443) target = $region32
        $region31: #{tpu_custom_call.1} parent=11 // pred_region
          _
        $region32: #{tpu_custom_call.1} parent=11 // pred_fallthru
          _
        // Predicated region
        $region33: #{tpu_custom_call.1} parent=11 // pred_check
          %p446 = pneg %p180
        $region34: #{tpu_custom_call.1} parent=11 // pred_check_branch
          %448 = sbr.rel (%p446) target = $region36
        $region35: #{tpu_custom_call.1} parent=11 // pred_region
          _
        $region36: #{tpu_custom_call.1} parent=11 // pred_fallthru
          _
        // Predicated region
        $region37: #{tpu_custom_call.1} parent=11 // pred_check
          %p449 = pneg %p201
        $region38: #{tpu_custom_call.1} parent=11 // pred_check_branch
          %451 = sbr.rel (%p449) target = $region40
        $region39: #{tpu_custom_call.1} parent=11 // pred_region
          _
        $region40: #{tpu_custom_call.1} parent=11 // pred_fallthru
          _
        // Predicated region
        $region41: #{tpu_custom_call.1} parent=11 // pred_check
          %p452 = pneg %p222
        $region42: #{tpu_custom_call.1} parent=11 // pred_check_branch
          %454 = sbr.rel (%p452) target = $region44
        $region43: #{tpu_custom_call.1} parent=11 // pred_region
          _
        $region44: #{tpu_custom_call.1} parent=11 // pred_fallthru
          _
        // Predicated region
        $region45: #{tpu_custom_call.1} parent=11 // pred_check
          %p455 = pneg %p243
        $region46: #{tpu_custom_call.1} parent=11 // pred_check_branch
          %457 = sbr.rel (%p455) target = $region48
        $region47: #{tpu_custom_call.1} parent=11 // pred_region
          _
        $region48: #{tpu_custom_call.1} parent=11 // pred_fallthru
          _
        // Predicated region
        $region49: #{tpu_custom_call.1} parent=11 // pred_check
          %p458 = pneg %p264
        $region50: #{tpu_custom_call.1} parent=11 // pred_check_branch
          %460 = sbr.rel (%p458) target = $region52
        $region51: #{tpu_custom_call.1} parent=11 // pred_region
          _
        $region52: #{tpu_custom_call.1} parent=11 // pred_fallthru
          _
        // Predicated region
        $region53: #{tpu_custom_call.1} parent=11 // pred_check
          %p461 = pneg %p285
        $region54: #{tpu_custom_call.1} parent=11 // pred_check_branch
          %463 = sbr.rel (%p461) target = $region56
        $region55: #{tpu_custom_call.1} parent=11 // pred_region
          _
        $region56: #{tpu_custom_call.1} parent=11 // pred_fallthru
          _
        // Predicated region
        $region57: #{tpu_custom_call.1} parent=11 // pred_check
          %p464 = pneg %p306
        $region58: #{tpu_custom_call.1} parent=11 // pred_check_branch
          %466 = sbr.rel (%p464) target = $region60
        $region59: #{tpu_custom_call.1} parent=11 // pred_region
          _
        $region60: #{tpu_custom_call.1} parent=11 // pred_fallthru
          _
        // Predicated region
        $region61: #{tpu_custom_call.1} parent=11 // pred_check
          %p467 = pneg %p327
        $region62: #{tpu_custom_call.1} parent=11 // pred_check_branch
          %469 = sbr.rel (%p467) target = $region64
        $region63: #{tpu_custom_call.1} parent=11 // pred_region
          _
        $region64: #{tpu_custom_call.1} parent=11 // pred_fallthru
          _
        // Predicated region
        $region65: #{tpu_custom_call.1} parent=11 // pred_check
          %p470 = pneg %p348
        $region66: #{tpu_custom_call.1} parent=11 // pred_check_branch
          %472 = sbr.rel (%p470) target = $region68
        $region67: #{tpu_custom_call.1} parent=11 // pred_region
          _
        $region68: #{tpu_custom_call.1} parent=11 // pred_fallthru
          _
        // Predicated region
        $region69: #{tpu_custom_call.1} parent=11 // pred_check
          %p473 = pneg %p369
        $region70: #{tpu_custom_call.1} parent=11 // pred_check_branch
          %475 = sbr.rel (%p473) target = $region72
        $region71: #{tpu_custom_call.1} parent=11 // pred_region
          _
        $region72: #{tpu_custom_call.1} parent=11 // pred_fallthru
          _
        // Predicated region
        $region73: #{tpu_custom_call.1} parent=11 // pred_check
          %p476 = pneg %p390
        $region74: #{tpu_custom_call.1} parent=11 // pred_check_branch
          %478 = sbr.rel (%p476) target = $region76
        $region75: #{tpu_custom_call.1} parent=11 // pred_region
          _
        $region76: #{tpu_custom_call.1} parent=11 // pred_fallthru
          _
      $region12: #{tpu_custom_call.1} parent=5 // pred_fallthru
        _
      %p479 = scmp.lt.s32.totalorder %s28, 2
      // Predicated region
      $region77: #{tpu_custom_call.1} parent=5 // pred_check
        %p480 = pneg %p479
      $region78: #{tpu_custom_call.1} parent=5 // pred_check_branch
        %482 = sbr.rel (%p480) target = $region80
      $region79: #{tpu_custom_call.1} parent=5 // pred_region
        // Predicated region
        $region81: #{tpu_custom_call.1} parent=79 // pred_check
          %p483 = pneg %p48
        $region82: #{tpu_custom_call.1} parent=79 // pred_check_branch
          %485 = sbr.rel (%p483) target = $region84
        $region83: #{tpu_custom_call.1} parent=79 // pred_region
          %s486 = smul.u32 2, %s28
          %p487 = scmp.lt.s32.totalorder %s486, 3
          %s488 = scalar_select %p487, %s486, 3
          %s489 = scalar_lea.vmem %s0, %s488
          %s490 = smul.u32 2, %s28
        $region84: #{tpu_custom_call.1} parent=79 // pred_fallthru
          _
      $region80: #{tpu_custom_call.1} parent=5 // pred_fallthru
        _
      %p491 = scmp.le.s32.totalorder 1, %s28
      %p492 = scmp.lt.s32.totalorder %s28, 3
      %p493 = pnand %p491, %p492
      %p494 = pneg %p493
      // Predicated region
      $region85: #{tpu_custom_call.1} parent=5 // pred_check
        _
      $region86: #{tpu_custom_call.1} parent=5 // pred_check_branch
        %496 = sbr.rel (%p493) target = $region88
      $region87: #{tpu_custom_call.1} parent=5 // pred_region
        %s497 = ssub.s32 %s28, 1
        %s498 = smul.u32 2, %s33
        %p499 = scmp.lt.s32.totalorder %s498, 3
        %s500 = scalar_select %p499, %s498, 3
        %s501 = scalar_lea.vmem %s0, %s500
        %p502 = pneg %p54
        %p503 = pneg %p51
        %p504 = pneg %p75
        %p505 = pneg %p72
        %p506 = pneg %p96
        %p507 = pneg %p93
        %p508 = pneg %p117
        %p509 = pneg %p114
        %p510 = pneg %p138
        %p511 = pneg %p135
        %p512 = pneg %p159
        %p513 = pneg %p156
        %p514 = pneg %p180
        %p515 = pneg %p177
        %p516 = pneg %p201
        %p517 = pneg %p198
        %p518 = pneg %p222
        %p519 = pneg %p219
        %p520 = pneg %p243
        %p521 = pneg %p240
        %p522 = pneg %p264
        %p523 = pneg %p261
        %p524 = pneg %p285
        %p525 = pneg %p282
        %p526 = pneg %p306
        %p527 = pneg %p303
        %p528 = pneg %p327
        %p529 = pneg %p324
        %p530 = pneg %p348
        %p531 = pneg %p345
        %p532 = pneg %p369
        %p533 = pneg %p366
        %p534 = pneg %p390
        %p535 = pneg %p387
        %p536 = pneg %p416
        %p537 = pneg %p413
        %s538 = sand.u32 %s403, 1
        %s539 = scalar_lea.sflag [#allocation4], %s538
        %s540 = sand.u32 %s403, 1
        %s541 = smul.addr %s540, 2
        %s542 = scalar_lea.vmem [#allocation3], %s541
        %s543 = smul.u32 2, %s33
        %p544 = scmp.lt.s32.totalorder %s543, 3
        %s545 = scalar_select %p544, %s543, 3
        %s546 = scalar_lea.vmem %s0, %s545
        %s547 = smul.u32 2, %s33
        %s548 = smul.u32 2, %s33
        %v549 = vld [vmem:[%s546] sm:$0x3]
        %v550 = vld [vmem:[%s1] sm:$0xff]
        %v551 = vld [vmem:[%s1 + $0x8] sm:$0xff]
        %v552 = vld [vmem:[%s1 + $0x10] sm:$0xff]
        %v553 = vld [vmem:[%s1 + $0x18] sm:$0xff]
        %v554 = vld [vmem:[%s1 + $0x20] sm:$0xff]
        %v555 = vld [vmem:[%s1 + $0x28] sm:$0xff]
        %v556 = vld [vmem:[%s1 + $0x30] sm:$0xff]
        %v557 = vld [vmem:[%s1 + $0x38] sm:$0xff]
        %v558 = vld [vmem:[%s1 + $0x40] sm:$0xff]
        %v559 = vld [vmem:[%s1 + $0x48] sm:$0xff]
        %v560 = vld [vmem:[%s1 + $0x50] sm:$0xff]
        %v561 = vld [vmem:[%s1 + $0x58] sm:$0xff]
        %v562 = vld [vmem:[%s1 + $0x60] sm:$0xff]
        %v563 = vld [vmem:[%s1 + $0x68] sm:$0xff]
        %v564 = vld [vmem:[%s1 + $0x70] sm:$0xff]
        %v565 = vld [vmem:[%s1 + $0x78] sm:$0xff]
        %567 = vset.pattern.permute.xlu0 0
        %568 = vperm.xlu0 %567, %v550
        %v569 = vpop.permute.xlu0 %568
        %572 = vset.pattern.permute.xlu0 0
        %573 = vperm.xlu0 %572, %v551
        %v574 = vpop.permute.xlu0 %573
        %577 = vset.pattern.permute.xlu0 0
        %578 = vperm.xlu0 %577, %v552
        %v579 = vpop.permute.xlu0 %578
        %582 = vset.pattern.permute.xlu0 0
        %583 = vperm.xlu0 %582, %v553
        %v584 = vpop.permute.xlu0 %583
        %587 = vset.pattern.permute.xlu0 0
        %588 = vperm.xlu0 %587, %v554
        %v589 = vpop.permute.xlu0 %588
        %592 = vset.pattern.permute.xlu0 0
        %593 = vperm.xlu0 %592, %v555
        %v594 = vpop.permute.xlu0 %593
        %597 = vset.pattern.permute.xlu0 0
        %598 = vperm.xlu0 %597, %v556
        %v599 = vpop.permute.xlu0 %598
        %602 = vset.pattern.permute.xlu0 0
        %603 = vperm.xlu0 %602, %v557
        %v604 = vpop.permute.xlu0 %603
        %607 = vset.pattern.permute.xlu0 0
        %608 = vperm.xlu0 %607, %v558
        %v609 = vpop.permute.xlu0 %608
        %612 = vset.pattern.permute.xlu0 0
        %613 = vperm.xlu0 %612, %v559
        %v614 = vpop.permute.xlu0 %613
        %617 = vset.pattern.permute.xlu0 0
        %618 = vperm.xlu0 %617, %v560
        %v619 = vpop.permute.xlu0 %618
        %622 = vset.pattern.permute.xlu0 0
        %623 = vperm.xlu0 %622, %v561
        %v624 = vpop.permute.xlu0 %623
        %627 = vset.pattern.permute.xlu0 0
        %628 = vperm.xlu0 %627, %v562
        %v629 = vpop.permute.xlu0 %628
        %632 = vset.pattern.permute.xlu0 0
        %633 = vperm.xlu0 %632, %v563
        %v634 = vpop.permute.xlu0 %633
        %637 = vset.pattern.permute.xlu0 0
        %638 = vperm.xlu0 %637, %v564
        %v639 = vpop.permute.xlu0 %638
        %642 = vset.pattern.permute.xlu0 0
        %643 = vperm.xlu0 %642, %v565
        %v644 = vpop.permute.xlu0 %643
        %v647 = vlaneseq
        %v648 = vshrl.u32 %v647, 7
        %v649 = vsub.s32 0, %v648
        %v650 = vrot.slane %v549, %v649
        %v651 = vlaneseq
        %v652 = vshrl.u32 %v651, 7
        %v653 = vsub.s32 1, %v652
        %v654 = vrot.slane %v549, %v653
        %v657 = vmul.f32 %v569, %v650
        %v658 = vmul.f32 %v569, %v654
        %v659 = vmul.f32 %v574, %v650
        %v660 = vmul.f32 %v574, %v654
        %v661 = vmul.f32 %v579, %v650
        %v662 = vmul.f32 %v579, %v654
        %v663 = vmul.f32 %v584, %v650
        %v664 = vmul.f32 %v584, %v654
        %v665 = vmul.f32 %v589, %v650
        %v666 = vmul.f32 %v589, %v654
        %v667 = vmul.f32 %v594, %v650
        %v668 = vmul.f32 %v594, %v654
        %v669 = vmul.f32 %v599, %v650
        %v670 = vmul.f32 %v599, %v654
        %v671 = vmul.f32 %v604, %v650
        %v672 = vmul.f32 %v604, %v654
        %v673 = vmul.f32 %v609, %v650
        %v674 = vmul.f32 %v609, %v654
        %v675 = vmul.f32 %v614, %v650
        %v676 = vmul.f32 %v614, %v654
        %v677 = vmul.f32 %v619, %v650
        %v678 = vmul.f32 %v619, %v654
        %v679 = vmul.f32 %v624, %v650
        %v680 = vmul.f32 %v624, %v654
        %v681 = vmul.f32 %v629, %v650
        %v682 = vmul.f32 %v629, %v654
        %v683 = vmul.f32 %v634, %v650
        %v684 = vmul.f32 %v634, %v654
        %v685 = vmul.f32 %v639, %v650
        %v686 = vmul.f32 %v639, %v654
        %v687 = vmul.f32 %v644, %v650
        %v688 = vmul.f32 %v644, %v654
        %v689 = vld [vmem:[%s2] sm:$0xff]
        %v690 = vld [vmem:[%s2 + $0x8] sm:$0xff]
        %v691 = vld [vmem:[%s2 + $0x10] sm:$0xff]
        %v692 = vld [vmem:[%s2 + $0x18] sm:$0xff]
        %v693 = vld [vmem:[%s2 + $0x20] sm:$0xff]
        %v694 = vld [vmem:[%s2 + $0x28] sm:$0xff]
        %v695 = vld [vmem:[%s2 + $0x30] sm:$0xff]
        %v696 = vld [vmem:[%s2 + $0x38] sm:$0xff]
        %v697 = vld [vmem:[%s2 + $0x40] sm:$0xff]
        %v698 = vld [vmem:[%s2 + $0x48] sm:$0xff]
        %v699 = vld [vmem:[%s2 + $0x50] sm:$0xff]
        %v700 = vld [vmem:[%s2 + $0x58] sm:$0xff]
        %v701 = vld [vmem:[%s2 + $0x60] sm:$0xff]
        %v702 = vld [vmem:[%s2 + $0x68] sm:$0xff]
        %v703 = vld [vmem:[%s2 + $0x70] sm:$0xff]
        %v704 = vld [vmem:[%s2 + $0x78] sm:$0xff]
        %706 = vset.pattern.permute.xlu0 0
        %707 = vperm.xlu0 %706, %v689
        %v708 = vpop.permute.xlu0 %707
        %711 = vset.pattern.permute.xlu0 0
        %712 = vperm.xlu0 %711, %v690
        %v713 = vpop.permute.xlu0 %712
        %716 = vset.pattern.permute.xlu0 0
        %717 = vperm.xlu0 %716, %v691
        %v718 = vpop.permute.xlu0 %717
        %721 = vset.pattern.permute.xlu0 0
        %722 = vperm.xlu0 %721, %v692
        %v723 = vpop.permute.xlu0 %722
        %726 = vset.pattern.permute.xlu0 0
        %727 = vperm.xlu0 %726, %v693
        %v728 = vpop.permute.xlu0 %727
        %731 = vset.pattern.permute.xlu0 0
        %732 = vperm.xlu0 %731, %v694
        %v733 = vpop.permute.xlu0 %732
        %736 = vset.pattern.permute.xlu0 0
        %737 = vperm.xlu0 %736, %v695
        %v738 = vpop.permute.xlu0 %737
        %741 = vset.pattern.permute.xlu0 0
        %742 = vperm.xlu0 %741, %v696
        %v743 = vpop.permute.xlu0 %742
        %746 = vset.pattern.permute.xlu0 0
        %747 = vperm.xlu0 %746, %v697
        %v748 = vpop.permute.xlu0 %747
        %751 = vset.pattern.permute.xlu0 0
        %752 = vperm.xlu0 %751, %v698
        %v753 = vpop.permute.xlu0 %752
        %756 = vset.pattern.permute.xlu0 0
        %757 = vperm.xlu0 %756, %v699
        %v758 = vpop.permute.xlu0 %757
        %761 = vset.pattern.permute.xlu0 0
        %762 = vperm.xlu0 %761, %v700
        %v763 = vpop.permute.xlu0 %762
        %766 = vset.pattern.permute.xlu0 0
        %767 = vperm.xlu0 %766, %v701
        %v768 = vpop.permute.xlu0 %767
        %771 = vset.pattern.permute.xlu0 0
        %772 = vperm.xlu0 %771, %v702
        %v773 = vpop.permute.xlu0 %772
        %776 = vset.pattern.permute.xlu0 0
        %777 = vperm.xlu0 %776, %v703
        %v778 = vpop.permute.xlu0 %777
        %781 = vset.pattern.permute.xlu0 0
        %782 = vperm.xlu0 %781, %v704
        %v783 = vpop.permute.xlu0 %782
        %v785 = vadd.f32 %v657, %v708
        %v786 = vadd.f32 %v658, %v708
        %v787 = vadd.f32 %v659, %v713
        %v788 = vadd.f32 %v660, %v713
        %v789 = vadd.f32 %v661, %v718
        %v790 = vadd.f32 %v662, %v718
        %v791 = vadd.f32 %v663, %v723
        %v792 = vadd.f32 %v664, %v723
        %v793 = vadd.f32 %v665, %v728
        %v794 = vadd.f32 %v666, %v728
        %v795 = vadd.f32 %v667, %v733
        %v796 = vadd.f32 %v668, %v733
        %v797 = vadd.f32 %v669, %v738
        %v798 = vadd.f32 %v670, %v738
        %v799 = vadd.f32 %v671, %v743
        %v800 = vadd.f32 %v672, %v743
        %v801 = vadd.f32 %v673, %v748
        %v802 = vadd.f32 %v674, %v748
        %v803 = vadd.f32 %v675, %v753
        %v804 = vadd.f32 %v676, %v753
        %v805 = vadd.f32 %v677, %v758
        %v806 = vadd.f32 %v678, %v758
        %v807 = vadd.f32 %v679, %v763
        %v808 = vadd.f32 %v680, %v763
        %v809 = vadd.f32 %v681, %v768
        %v810 = vadd.f32 %v682, %v768
        %v811 = vadd.f32 %v683, %v773
        %v812 = vadd.f32 %v684, %v773
        %v813 = vadd.f32 %v685, %v778
        %v814 = vadd.f32 %v686, %v778
        %v815 = vadd.f32 %v687, %v783
        %v816 = vadd.f32 %v688, %v783
        %v817 = vtanh.pop %v785
        %v818 = vtanh.pop %v786
        %v819 = vtanh.pop %v787
        %v820 = vtanh.pop %v788
        %v821 = vtanh.pop %v789
        %v822 = vtanh.pop %v790
        %v823 = vtanh.pop %v791
        %v824 = vtanh.pop %v792
        %v825 = vtanh.pop %v793
        %v826 = vtanh.pop %v794
        %v827 = vtanh.pop %v795
        %v828 = vtanh.pop %v796
        %v829 = vtanh.pop %v797
        %v830 = vtanh.pop %v798
        %v831 = vtanh.pop %v799
        %v832 = vtanh.pop %v800
        %v833 = vtanh.pop %v801
        %v834 = vtanh.pop %v802
        %v835 = vtanh.pop %v803
        %v836 = vtanh.pop %v804
        %v837 = vtanh.pop %v805
        %v838 = vtanh.pop %v806
        %v839 = vtanh.pop %v807
        %v840 = vtanh.pop %v808
        %v841 = vtanh.pop %v809
        %v842 = vtanh.pop %v810
        %v843 = vtanh.pop %v811
        %v844 = vtanh.pop %v812
        %v845 = vtanh.pop %v813
        %v846 = vtanh.pop %v814
        %v847 = vtanh.pop %v815
        %v848 = vtanh.pop %v816
        %v849 = vld [vmem:[%s3] sm:$0xff]
        %v850 = vld [vmem:[%s3 + $0x8] sm:$0xff]
        %v851 = vld [vmem:[%s3 + $0x10] sm:$0xff]
        %v852 = vld [vmem:[%s3 + $0x18] sm:$0xff]
        %v853 = vld [vmem:[%s3 + $0x20] sm:$0xff]
        %v854 = vld [vmem:[%s3 + $0x28] sm:$0xff]
        %v855 = vld [vmem:[%s3 + $0x30] sm:$0xff]
        %v856 = vld [vmem:[%s3 + $0x38] sm:$0xff]
        %v857 = vld [vmem:[%s3 + $0x40] sm:$0xff]
        %v858 = vld [vmem:[%s3 + $0x48] sm:$0xff]
        %v859 = vld [vmem:[%s3 + $0x50] sm:$0xff]
        %v860 = vld [vmem:[%s3 + $0x58] sm:$0xff]
        %v861 = vld [vmem:[%s3 + $0x60] sm:$0xff]
        %v862 = vld [vmem:[%s3 + $0x68] sm:$0xff]
        %v863 = vld [vmem:[%s3 + $0x70] sm:$0xff]
        %v864 = vld [vmem:[%s3 + $0x78] sm:$0xff]
        %v865 = vld [vmem:[%s4] sm:$0xff]
        %v866 = vld [vmem:[%s4 + $0x8] sm:$0xff]
        %v867 = vld [vmem:[%s4 + $0x10] sm:$0xff]
        %v868 = vld [vmem:[%s4 + $0x18] sm:$0xff]
        %v869 = vld [vmem:[%s4 + $0x20] sm:$0xff]
        %v870 = vld [vmem:[%s4 + $0x28] sm:$0xff]
        %v871 = vld [vmem:[%s4 + $0x30] sm:$0xff]
        %v872 = vld [vmem:[%s4 + $0x38] sm:$0xff]
        %v873 = vld [vmem:[%s4 + $0x40] sm:$0xff]
        %v874 = vld [vmem:[%s4 + $0x48] sm:$0xff]
        %v875 = vld [vmem:[%s4 + $0x50] sm:$0xff]
        %v876 = vld [vmem:[%s4 + $0x58] sm:$0xff]
        %v877 = vld [vmem:[%s4 + $0x60] sm:$0xff]
        %v878 = vld [vmem:[%s4 + $0x68] sm:$0xff]
        %v879 = vld [vmem:[%s4 + $0x70] sm:$0xff]
        %v880 = vld [vmem:[%s4 + $0x78] sm:$0xff]
        %882 = vset.pattern.permute.xlu0 0
        %883 = vperm.xlu0 %882, %v865
        %v884 = vpop.permute.xlu0 %883
        %887 = vset.pattern.permute.xlu0 0
        %888 = vperm.xlu0 %887, %v866
        %v889 = vpop.permute.xlu0 %888
        %892 = vset.pattern.permute.xlu0 0
        %893 = vperm.xlu0 %892, %v867
        %v894 = vpop.permute.xlu0 %893
        %897 = vset.pattern.permute.xlu0 0
        %898 = vperm.xlu0 %897, %v868
        %v899 = vpop.permute.xlu0 %898
        %902 = vset.pattern.permute.xlu0 0
        %903 = vperm.xlu0 %902, %v869
        %v904 = vpop.permute.xlu0 %903
        %907 = vset.pattern.permute.xlu0 0
        %908 = vperm.xlu0 %907, %v870
        %v909 = vpop.permute.xlu0 %908
        %912 = vset.pattern.permute.xlu0 0
        %913 = vperm.xlu0 %912, %v871
        %v914 = vpop.permute.xlu0 %913
        %917 = vset.pattern.permute.xlu0 0
        %918 = vperm.xlu0 %917, %v872
        %v919 = vpop.permute.xlu0 %918
        %922 = vset.pattern.permute.xlu0 0
        %923 = vperm.xlu0 %922, %v873
        %v924 = vpop.permute.xlu0 %923
        %927 = vset.pattern.permute.xlu0 0
        %928 = vperm.xlu0 %927, %v874
        %v929 = vpop.permute.xlu0 %928
        %932 = vset.pattern.permute.xlu0 0
        %933 = vperm.xlu0 %932, %v875
        %v934 = vpop.permute.xlu0 %933
        %937 = vset.pattern.permute.xlu0 0
        %938 = vperm.xlu0 %937, %v876
        %v939 = vpop.permute.xlu0 %938
        %942 = vset.pattern.permute.xlu0 0
        %943 = vperm.xlu0 %942, %v877
        %v944 = vpop.permute.xlu0 %943
        %947 = vset.pattern.permute.xlu0 0
        %948 = vperm.xlu0 %947, %v878
        %v949 = vpop.permute.xlu0 %948
        %952 = vset.pattern.permute.xlu0 0
        %953 = vperm.xlu0 %952, %v879
        %v954 = vpop.permute.xlu0 %953
        %957 = vset.pattern.permute.xlu0 0
        %958 = vperm.xlu0 %957, %v880
        %v959 = vpop.permute.xlu0 %958
        %961 = vmatprep.subr.mxu0 %v818
        %962 = vmatpush1.msra.mxu0 %v817
        %963 = vmatprep.subr.mxu0 %v820
        %964 = vmatpush1.msra.mxu0 %v819
        %965 = vmatprep.subr.mxu0 %v822
        %966 = vmatpush1.msra.mxu0 %v821
        %967 = vmatprep.subr.mxu0 %v824
        %968 = vmatpush1.msra.mxu0 %v823
        %969 = vmatprep.subr.mxu0 %v826
        %970 = vmatpush1.msra.mxu0 %v825
        %971 = vmatprep.subr.mxu0 %v828
        %972 = vmatpush1.msra.mxu0 %v827
        %973 = vmatprep.subr.mxu0 %v830
        %974 = vmatpush1.msra.mxu0 %v829
        %975 = vmatprep.subr.mxu0 %v832
        %976 = vmatpush1.msra.mxu0 %v831
        %977 = vmatprep.subr.mxu0 %v834
        %978 = vmatpush1.msra.mxu0 %v833
        %979 = vmatprep.subr.mxu0 %v836
        %980 = vmatpush1.msra.mxu0 %v835
        %981 = vmatprep.subr.mxu0 %v838
        %982 = vmatpush1.msra.mxu0 %v837
        %983 = vmatprep.subr.mxu0 %v840
        %984 = vmatpush1.msra.mxu0 %v839
        %985 = vmatprep.subr.mxu0 %v842
        %986 = vmatpush1.msra.mxu0 %v841
        %987 = vmatprep.subr.mxu0 %v844
        %988 = vmatpush1.msra.mxu0 %v843
        %989 = vmatprep.subr.mxu0 %v846
        %990 = vmatpush1.msra.mxu0 %v845
        %991 = vmatprep.subr.mxu0 %v848
        %992 = vmatpush1.msra.mxu0 %v847
        %993 = vmatprep.subr.mxu0 0.0
        %994 = vmatpush1.msra.mxu0 0.0
        %995 = vmatprep.subr.mxu0 0.0
        %996 = vmatpush1.msra.mxu0 0.0
        %997 = vmatprep.subr.mxu0 0.0
        %998 = vmatpush1.msra.mxu0 0.0
        %999 = vmatprep.subr.mxu0 0.0
        %1000 = vmatpush1.msra.mxu0 0.0
        %1001 = vmatprep.subr.mxu0 0.0
        %1002 = vmatpush1.msra.mxu0 0.0
        %1003 = vmatprep.subr.mxu0 0.0
        %1004 = vmatpush1.msra.mxu0 0.0
        %1005 = vmatprep.subr.mxu0 0.0
        %1006 = vmatpush1.msra.mxu0 0.0
        %1007 = vmatprep.subr.mxu0 0.0
        %1008 = vmatpush1.msra.mxu0 0.0
        %1009 = vmatprep.subr.mxu0 0.0
        %1010 = vmatpush1.msra.mxu0 0.0
        %1011 = vmatprep.subr.mxu0 0.0
        %1012 = vmatpush1.msra.mxu0 0.0
        %1013 = vmatprep.subr.mxu0 0.0
        %1014 = vmatpush1.msra.mxu0 0.0
        %1015 = vmatprep.subr.mxu0 0.0
        %1016 = vmatpush1.msra.mxu0 0.0
        %1017 = vmatprep.subr.mxu0 0.0
        %1018 = vmatpush1.msra.mxu0 0.0
        %1019 = vmatprep.subr.mxu0 0.0
        %1020 = vmatpush1.msra.mxu0 0.0
        %1021 = vmatprep.subr.mxu0 0.0
        %1022 = vmatpush1.msra.mxu0 0.0
        %1023 = vmatprep.subr.mxu0 0.0
        %1024 = vmatpush1.msra.mxu0 0.0
        %1025 = vmatprep.mubr.f32.mxu0 0.0
        %1026 = vmatmul.mubr.f32.gmra.mrb[0].mxu0 %v849
        %v1027 = vpop.f32.mrb[0].mxu0
        %v1028 = vadd.f32 %v884, %v1027
        %v1029 = vpop.f32.mrb[0].mxu0
        %v1030 = vadd.f32 %v884, %v1029
        %1031 = vmatprep.mubr.f32.mxu0 0.0
        %1032 = vmatmul.mubr.f32.gmra.mrb[0].mxu0 %v850
        %v1033 = vpop.f32.mrb[0].mxu0
        %v1034 = vadd.f32 %v889, %v1033
        %v1035 = vpop.f32.mrb[0].mxu0
        %v1036 = vadd.f32 %v889, %v1035
        %1037 = vmatprep.mubr.f32.mxu0 0.0
        %1038 = vmatmul.mubr.f32.gmra.mrb[0].mxu0 %v851
        %v1039 = vpop.f32.mrb[0].mxu0
        %v1040 = vadd.f32 %v894, %v1039
        %v1041 = vpop.f32.mrb[0].mxu0
        %v1042 = vadd.f32 %v894, %v1041
        %1043 = vmatprep.mubr.f32.mxu0 0.0
        %1044 = vmatmul.mubr.f32.gmra.mrb[0].mxu0 %v852
        %v1045 = vpop.f32.mrb[0].mxu0
        %v1046 = vadd.f32 %v899, %v1045
        %v1047 = vpop.f32.mrb[0].mxu0
        %v1048 = vadd.f32 %v899, %v1047
        %1049 = vmatprep.mubr.f32.mxu0 0.0
        %1050 = vmatmul.mubr.f32.gmra.mrb[0].mxu0 %v853
        %v1051 = vpop.f32.mrb[0].mxu0
        %v1052 = vadd.f32 %v904, %v1051
        %v1053 = vpop.f32.mrb[0].mxu0
        %v1054 = vadd.f32 %v904, %v1053
        %1055 = vmatprep.mubr.f32.mxu0 0.0
        %1056 = vmatmul.mubr.f32.gmra.mrb[0].mxu0 %v854
        %v1057 = vpop.f32.mrb[0].mxu0
        %v1058 = vadd.f32 %v909, %v1057
        %v1059 = vpop.f32.mrb[0].mxu0
        %v1060 = vadd.f32 %v909, %v1059
        %1061 = vmatprep.mubr.f32.mxu0 0.0
        %1062 = vmatmul.mubr.f32.gmra.mrb[0].mxu0 %v855
        %v1063 = vpop.f32.mrb[0].mxu0
        %v1064 = vadd.f32 %v914, %v1063
        %v1065 = vpop.f32.mrb[0].mxu0
        %v1066 = vadd.f32 %v914, %v1065
        %1067 = vmatprep.mubr.f32.mxu0 0.0
        %1068 = vmatmul.mubr.f32.gmra.mrb[0].mxu0 %v856
        %v1069 = vpop.f32.mrb[0].mxu0
        %v1070 = vadd.f32 %v919, %v1069
        %v1071 = vpop.f32.mrb[0].mxu0
        %v1072 = vadd.f32 %v919, %v1071
        %1073 = vmatprep.mubr.f32.mxu0 0.0
        %1074 = vmatmul.mubr.f32.gmra.mrb[0].mxu0 %v857
        %v1075 = vpop.f32.mrb[0].mxu0
        %v1076 = vadd.f32 %v924, %v1075
        %v1077 = vpop.f32.mrb[0].mxu0
        %v1078 = vadd.f32 %v924, %v1077
        %1079 = vmatprep.mubr.f32.mxu0 0.0
        %1080 = vmatmul.mubr.f32.gmra.mrb[0].mxu0 %v858
        %v1081 = vpop.f32.mrb[0].mxu0
        %v1082 = vadd.f32 %v929, %v1081
        %v1083 = vpop.f32.mrb[0].mxu0
        %v1084 = vadd.f32 %v929, %v1083
        %1085 = vmatprep.mubr.f32.mxu0 0.0
        %1086 = vmatmul.mubr.f32.gmra.mrb[0].mxu0 %v859
        %v1087 = vpop.f32.mrb[0].mxu0
        %v1088 = vadd.f32 %v934, %v1087
        %v1089 = vpop.f32.mrb[0].mxu0
        %v1090 = vadd.f32 %v934, %v1089
        %1091 = vmatprep.mubr.f32.mxu0 0.0
        %1092 = vmatmul.mubr.f32.gmra.mrb[0].mxu0 %v860
        %v1093 = vpop.f32.mrb[0].mxu0
        %v1094 = vadd.f32 %v939, %v1093
        %v1095 = vpop.f32.mrb[0].mxu0
        %v1096 = vadd.f32 %v939, %v1095
        %1097 = vmatprep.mubr.f32.mxu0 0.0
        %1098 = vmatmul.mubr.f32.gmra.mrb[0].mxu0 %v861
        %v1099 = vpop.f32.mrb[0].mxu0
        %v1100 = vadd.f32 %v944, %v1099
        %v1101 = vpop.f32.mrb[0].mxu0
        %v1102 = vadd.f32 %v944, %v1101
        %1103 = vmatprep.mubr.f32.mxu0 0.0
        %1104 = vmatmul.mubr.f32.gmra.mrb[0].mxu0 %v862
        %v1105 = vpop.f32.mrb[0].mxu0
        %v1106 = vadd.f32 %v949, %v1105
        %v1107 = vpop.f32.mrb[0].mxu0
        %v1108 = vadd.f32 %v949, %v1107
        %1109 = vmatprep.mubr.f32.mxu0 0.0
        %1110 = vmatmul.mubr.f32.gmra.mrb[0].mxu0 %v863
        %v1111 = vpop.f32.mrb[0].mxu0
        %v1112 = vadd.f32 %v954, %v1111
        %v1113 = vpop.f32.mrb[0].mxu0
        %v1114 = vadd.f32 %v954, %v1113
        %1115 = vmatprep.mubr.f32.mxu0 0.0
        %1116 = vmatmul.mubr.f32.gmra.mrb[0].mxu0 %v864
        %v1117 = vpop.f32.mrb[0].mxu0
        %v1118 = vadd.f32 %v959, %v1117
        %v1119 = vpop.f32.mrb[0].mxu0
        %v1120 = vadd.f32 %v959, %v1119
        %1121 = vdwg.mxu0
        %v1122 = vtanh.pop %v1028
        %v1123 = vtanh.pop %v1030
        %v1124 = vtanh.pop %v1034
        %v1125 = vtanh.pop %v1036
        %v1126 = vtanh.pop %v1040
        %v1127 = vtanh.pop %v1042
        %v1128 = vtanh.pop %v1046
        %v1129 = vtanh.pop %v1048
        %v1130 = vtanh.pop %v1052
        %v1131 = vtanh.pop %v1054
        %v1132 = vtanh.pop %v1058
        %v1133 = vtanh.pop %v1060
        %v1134 = vtanh.pop %v1064
        %v1135 = vtanh.pop %v1066
        %v1136 = vtanh.pop %v1070
        %v1137 = vtanh.pop %v1072
        %v1138 = vtanh.pop %v1076
        %v1139 = vtanh.pop %v1078
        %v1140 = vtanh.pop %v1082
        %v1141 = vtanh.pop %v1084
        %v1142 = vtanh.pop %v1088
        %v1143 = vtanh.pop %v1090
        %v1144 = vtanh.pop %v1094
        %v1145 = vtanh.pop %v1096
        %v1146 = vtanh.pop %v1100
        %v1147 = vtanh.pop %v1102
        %v1148 = vtanh.pop %v1106
        %v1149 = vtanh.pop %v1108
        %v1150 = vtanh.pop %v1112
        %v1151 = vtanh.pop %v1114
        %v1152 = vtanh.pop %v1118
        %v1153 = vtanh.pop %v1120
        %v1154 = vld [vmem:[%s5] sm:$0xff]
        %v1155 = vld [vmem:[%s5 + $0x8] sm:$0xff]
        %v1156 = vld [vmem:[%s5 + $0x10] sm:$0xff]
        %v1157 = vld [vmem:[%s5 + $0x18] sm:$0xff]
        %v1158 = vld [vmem:[%s5 + $0x20] sm:$0xff]
        %v1159 = vld [vmem:[%s5 + $0x28] sm:$0xff]
        %v1160 = vld [vmem:[%s5 + $0x30] sm:$0xff]
        %v1161 = vld [vmem:[%s5 + $0x38] sm:$0xff]
        %v1162 = vld [vmem:[%s5 + $0x40] sm:$0xff]
        %v1163 = vld [vmem:[%s5 + $0x48] sm:$0xff]
        %v1164 = vld [vmem:[%s5 + $0x50] sm:$0xff]
        %v1165 = vld [vmem:[%s5 + $0x58] sm:$0xff]
        %v1166 = vld [vmem:[%s5 + $0x60] sm:$0xff]
        %v1167 = vld [vmem:[%s5 + $0x68] sm:$0xff]
        %v1168 = vld [vmem:[%s5 + $0x70] sm:$0xff]
        %v1169 = vld [vmem:[%s5 + $0x78] sm:$0xff]
        %v1170 = vld [vmem:[%s6] sm:$0xff]
        %v1171 = vld [vmem:[%s6 + $0x8] sm:$0xff]
        %v1172 = vld [vmem:[%s6 + $0x10] sm:$0xff]
        %v1173 = vld [vmem:[%s6 + $0x18] sm:$0xff]
        %v1174 = vld [vmem:[%s6 + $0x20] sm:$0xff]
        %v1175 = vld [vmem:[%s6 + $0x28] sm:$0xff]
        %v1176 = vld [vmem:[%s6 + $0x30] sm:$0xff]
        %v1177 = vld [vmem:[%s6 + $0x38] sm:$0xff]
        %v1178 = vld [vmem:[%s6 + $0x40] sm:$0xff]
        %v1179 = vld [vmem:[%s6 + $0x48] sm:$0xff]
        %v1180 = vld [vmem:[%s6 + $0x50] sm:$0xff]
        %v1181 = vld [vmem:[%s6 + $0x58] sm:$0xff]
        %v1182 = vld [vmem:[%s6 + $0x60] sm:$0xff]
        %v1183 = vld [vmem:[%s6 + $0x68] sm:$0xff]
        %v1184 = vld [vmem:[%s6 + $0x70] sm:$0xff]
        %v1185 = vld [vmem:[%s6 + $0x78] sm:$0xff]
        %1187 = vset.pattern.permute.xlu0 0
        %1188 = vperm.xlu0 %1187, %v1170
        %v1189 = vpop.permute.xlu0 %1188
        %1192 = vset.pattern.permute.xlu0 0
        %1193 = vperm.xlu0 %1192, %v1171
        %v1194 = vpop.permute.xlu0 %1193
        %1197 = vset.pattern.permute.xlu0 0
        %1198 = vperm.xlu0 %1197, %v1172
        %v1199 = vpop.permute.xlu0 %1198
        %1202 = vset.pattern.permute.xlu0 0
        %1203 = vperm.xlu0 %1202, %v1173
        %v1204 = vpop.permute.xlu0 %1203
        %1207 = vset.pattern.permute.xlu0 0
        %1208 = vperm.xlu0 %1207, %v1174
        %v1209 = vpop.permute.xlu0 %1208
        %1212 = vset.pattern.permute.xlu0 0
        %1213 = vperm.xlu0 %1212, %v1175
        %v1214 = vpop.permute.xlu0 %1213
        %1217 = vset.pattern.permute.xlu0 0
        %1218 = vperm.xlu0 %1217, %v1176
        %v1219 = vpop.permute.xlu0 %1218
        %1222 = vset.pattern.permute.xlu0 0
        %1223 = vperm.xlu0 %1222, %v1177
        %v1224 = vpop.permute.xlu0 %1223
        %1227 = vset.pattern.permute.xlu0 0
        %1228 = vperm.xlu0 %1227, %v1178
        %v1229 = vpop.permute.xlu0 %1228
        %1232 = vset.pattern.permute.xlu0 0
        %1233 = vperm.xlu0 %1232, %v1179
        %v1234 = vpop.permute.xlu0 %1233
        %1237 = vset.pattern.permute.xlu0 0
        %1238 = vperm.xlu0 %1237, %v1180
        %v1239 = vpop.permute.xlu0 %1238
        %1242 = vset.pattern.permute.xlu0 0
        %1243 = vperm.xlu0 %1242, %v1181
        %v1244 = vpop.permute.xlu0 %1243
        %1247 = vset.pattern.permute.xlu0 0
        %1248 = vperm.xlu0 %1247, %v1182
        %v1249 = vpop.permute.xlu0 %1248
        %1252 = vset.pattern.permute.xlu0 0
        %1253 = vperm.xlu0 %1252, %v1183
        %v1254 = vpop.permute.xlu0 %1253
        %1257 = vset.pattern.permute.xlu0 0
        %1258 = vperm.xlu0 %1257, %v1184
        %v1259 = vpop.permute.xlu0 %1258
        %1262 = vset.pattern.permute.xlu0 0
        %1263 = vperm.xlu0 %1262, %v1185
        %v1264 = vpop.permute.xlu0 %1263
        %1266 = vmatprep.subr.mxu0 %v1123
        %1267 = vmatpush1.msra.mxu0 %v1122
        %1268 = vmatprep.subr.mxu0 %v1125
        %1269 = vmatpush1.msra.mxu0 %v1124
        %1270 = vmatprep.subr.mxu0 %v1127
        %1271 = vmatpush1.msra.mxu0 %v1126
        %1272 = vmatprep.subr.mxu0 %v1129
        %1273 = vmatpush1.msra.mxu0 %v1128
        %1274 = vmatprep.subr.mxu0 %v1131
        %1275 = vmatpush1.msra.mxu0 %v1130
        %1276 = vmatprep.subr.mxu0 %v1133
        %1277 = vmatpush1.msra.mxu0 %v1132
        %1278 = vmatprep.subr.mxu0 %v1135
        %1279 = vmatpush1.msra.mxu0 %v1134
        %1280 = vmatprep.subr.mxu0 %v1137
        %1281 = vmatpush1.msra.mxu0 %v1136
        %1282 = vmatprep.subr.mxu0 %v1139
        %1283 = vmatpush1.msra.mxu0 %v1138
        %1284 = vmatprep.subr.mxu0 %v1141
        %1285 = vmatpush1.msra.mxu0 %v1140
        %1286 = vmatprep.subr.mxu0 %v1143
        %1287 = vmatpush1.msra.mxu0 %v1142
        %1288 = vmatprep.subr.mxu0 %v1145
        %1289 = vmatpush1.msra.mxu0 %v1144
        %1290 = vmatprep.subr.mxu0 %v1147
        %1291 = vmatpush1.msra.mxu0 %v1146
        %1292 = vmatprep.subr.mxu0 %v1149
        %1293 = vmatpush1.msra.mxu0 %v1148
        %1294 = vmatprep.subr.mxu0 %v1151
        %1295 = vmatpush1.msra.mxu0 %v1150
        %1296 = vmatprep.subr.mxu0 %v1153
        %1297 = vmatpush1.msra.mxu0 %v1152
        %1298 = vmatprep.subr.mxu0 0.0
        %1299 = vmatpush1.msra.mxu0 0.0
        %1300 = vmatprep.subr.mxu0 0.0
        %1301 = vmatpush1.msra.mxu0 0.0
        %1302 = vmatprep.subr.mxu0 0.0
        %1303 = vmatpush1.msra.mxu0 0.0
        %1304 = vmatprep.subr.mxu0 0.0
        %1305 = vmatpush1.msra.mxu0 0.0
        %1306 = vmatprep.subr.mxu0 0.0
        %1307 = vmatpush1.msra.mxu0 0.0
        %1308 = vmatprep.subr.mxu0 0.0
        %1309 = vmatpush1.msra.mxu0 0.0
        %1310 = vmatprep.subr.mxu0 0.0
        %1311 = vmatpush1.msra.mxu0 0.0
        %1312 = vmatprep.subr.mxu0 0.0
        %1313 = vmatpush1.msra.mxu0 0.0
        %1314 = vmatprep.subr.mxu0 0.0
        %1315 = vmatpush1.msra.mxu0 0.0
        %1316 = vmatprep.subr.mxu0 0.0
        %1317 = vmatpush1.msra.mxu0 0.0
        %1318 = vmatprep.subr.mxu0 0.0
        %1319 = vmatpush1.msra.mxu0 0.0
        %1320 = vmatprep.subr.mxu0 0.0
        %1321 = vmatpush1.msra.mxu0 0.0
        %1322 = vmatprep.subr.mxu0 0.0
        %1323 = vmatpush1.msra.mxu0 0.0
        %1324 = vmatprep.subr.mxu0 0.0
        %1325 = vmatpush1.msra.mxu0 0.0
        %1326 = vmatprep.subr.mxu0 0.0
        %1327 = vmatpush1.msra.mxu0 0.0
        %1328 = vmatprep.subr.mxu0 0.0
        %1329 = vmatpush1.msra.mxu0 0.0
        %1330 = vmatprep.mubr.f32.mxu0 0.0
        %1331 = vmatmul.mubr.f32.gmra.mrb[0].mxu0 %v1154
        %v1332 = vpop.f32.mrb[0].mxu0
        %v1333 = vadd.f32 %v1189, %v1332
        %v1334 = vpop.f32.mrb[0].mxu0
        %v1335 = vadd.f32 %v1189, %v1334
        %1336 = vmatprep.mubr.f32.mxu0 0.0
        %1337 = vmatmul.mubr.f32.gmra.mrb[0].mxu0 %v1155
        %v1338 = vpop.f32.mrb[0].mxu0
        %v1339 = vadd.f32 %v1194, %v1338
        %v1340 = vpop.f32.mrb[0].mxu0
        %v1341 = vadd.f32 %v1194, %v1340
        %1342 = vmatprep.mubr.f32.mxu0 0.0
        %1343 = vmatmul.mubr.f32.gmra.mrb[0].mxu0 %v1156
        %v1344 = vpop.f32.mrb[0].mxu0
        %v1345 = vadd.f32 %v1199, %v1344
        %v1346 = vpop.f32.mrb[0].mxu0
        %v1347 = vadd.f32 %v1199, %v1346
        %1348 = vmatprep.mubr.f32.mxu0 0.0
        %1349 = vmatmul.mubr.f32.gmra.mrb[0].mxu0 %v1157
        %v1350 = vpop.f32.mrb[0].mxu0
        %v1351 = vadd.f32 %v1204, %v1350
        %v1352 = vpop.f32.mrb[0].mxu0
        %v1353 = vadd.f32 %v1204, %v1352
        %1354 = vmatprep.mubr.f32.mxu0 0.0
        %1355 = vmatmul.mubr.f32.gmra.mrb[0].mxu0 %v1158
        %v1356 = vpop.f32.mrb[0].mxu0
        %v1357 = vadd.f32 %v1209, %v1356
        %v1358 = vpop.f32.mrb[0].mxu0
        %v1359 = vadd.f32 %v1209, %v1358
        %1360 = vmatprep.mubr.f32.mxu0 0.0
        %1361 = vmatmul.mubr.f32.gmra.mrb[0].mxu0 %v1159
        %v1362 = vpop.f32.mrb[0].mxu0
        %v1363 = vadd.f32 %v1214, %v1362
        %v1364 = vpop.f32.mrb[0].mxu0
        %v1365 = vadd.f32 %v1214, %v1364
        %1366 = vmatprep.mubr.f32.mxu0 0.0
        %1367 = vmatmul.mubr.f32.gmra.mrb[0].mxu0 %v1160
        %v1368 = vpop.f32.mrb[0].mxu0
        %v1369 = vadd.f32 %v1219, %v1368
        %v1370 = vpop.f32.mrb[0].mxu0
        %v1371 = vadd.f32 %v1219, %v1370
        %1372 = vmatprep.mubr.f32.mxu0 0.0
        %1373 = vmatmul.mubr.f32.gmra.mrb[0].mxu0 %v1161
        %v1374 = vpop.f32.mrb[0].mxu0
        %v1375 = vadd.f32 %v1224, %v1374
        %v1376 = vpop.f32.mrb[0].mxu0
        %v1377 = vadd.f32 %v1224, %v1376
        %1378 = vmatprep.mubr.f32.mxu0 0.0
        %1379 = vmatmul.mubr.f32.gmra.mrb[0].mxu0 %v1162
        %v1380 = vpop.f32.mrb[0].mxu0
        %v1381 = vadd.f32 %v1229, %v1380
        %v1382 = vpop.f32.mrb[0].mxu0
        %v1383 = vadd.f32 %v1229, %v1382
        %1384 = vmatprep.mubr.f32.mxu0 0.0
        %1385 = vmatmul.mubr.f32.gmra.mrb[0].mxu0 %v1163
        %v1386 = vpop.f32.mrb[0].mxu0
        %v1387 = vadd.f32 %v1234, %v1386
        %v1388 = vpop.f32.mrb[0].mxu0
        %v1389 = vadd.f32 %v1234, %v1388
        %1390 = vmatprep.mubr.f32.mxu0 0.0
        %1391 = vmatmul.mubr.f32.gmra.mrb[0].mxu0 %v1164
        %v1392 = vpop.f32.mrb[0].mxu0
        %v1393 = vadd.f32 %v1239, %v1392
        %v1394 = vpop.f32.mrb[0].mxu0
        %v1395 = vadd.f32 %v1239, %v1394
        %1396 = vmatprep.mubr.f32.mxu0 0.0
        %1397 = vmatmul.mubr.f32.gmra.mrb[0].mxu0 %v1165
        %v1398 = vpop.f32.mrb[0].mxu0
        %v1399 = vadd.f32 %v1244, %v1398
        %v1400 = vpop.f32.mrb[0].mxu0
        %v1401 = vadd.f32 %v1244, %v1400
        %1402 = vmatprep.mubr.f32.mxu0 0.0
        %1403 = vmatmul.mubr.f32.gmra.mrb[0].mxu0 %v1166
        %v1404 = vpop.f32.mrb[0].mxu0
        %v1405 = vadd.f32 %v1249, %v1404
        %v1406 = vpop.f32.mrb[0].mxu0
        %v1407 = vadd.f32 %v1249, %v1406
        %1408 = vmatprep.mubr.f32.mxu0 0.0
        %1409 = vmatmul.mubr.f32.gmra.mrb[0].mxu0 %v1167
        %v1410 = vpop.f32.mrb[0].mxu0
        %v1411 = vadd.f32 %v1254, %v1410
        %v1412 = vpop.f32.mrb[0].mxu0
        %v1413 = vadd.f32 %v1254, %v1412
        %1414 = vmatprep.mubr.f32.mxu0 0.0
        %1415 = vmatmul.mubr.f32.gmra.mrb[0].mxu0 %v1168
        %v1416 = vpop.f32.mrb[0].mxu0
        %v1417 = vadd.f32 %v1259, %v1416
        %v1418 = vpop.f32.mrb[0].mxu0
        %v1419 = vadd.f32 %v1259, %v1418
        %1420 = vmatprep.mubr.f32.mxu0 0.0
        %1421 = vmatmul.mubr.f32.gmra.mrb[0].mxu0 %v1169
        %v1422 = vpop.f32.mrb[0].mxu0
        %v1423 = vadd.f32 %v1264, %v1422
        %v1424 = vpop.f32.mrb[0].mxu0
        %v1425 = vadd.f32 %v1264, %v1424
        %1426 = vdwg.mxu0
        %v1427 = vtanh.pop %v1333
        %v1428 = vtanh.pop %v1335
        %v1429 = vtanh.pop %v1339
        %v1430 = vtanh.pop %v1341
        %v1431 = vtanh.pop %v1345
        %v1432 = vtanh.pop %v1347
        %v1433 = vtanh.pop %v1351
        %v1434 = vtanh.pop %v1353
        %v1435 = vtanh.pop %v1357
        %v1436 = vtanh.pop %v1359
        %v1437 = vtanh.pop %v1363
        %v1438 = vtanh.pop %v1365
        %v1439 = vtanh.pop %v1369
        %v1440 = vtanh.pop %v1371
        %v1441 = vtanh.pop %v1375
        %v1442 = vtanh.pop %v1377
        %v1443 = vtanh.pop %v1381
        %v1444 = vtanh.pop %v1383
        %v1445 = vtanh.pop %v1387
        %v1446 = vtanh.pop %v1389
        %v1447 = vtanh.pop %v1393
        %v1448 = vtanh.pop %v1395
        %v1449 = vtanh.pop %v1399
        %v1450 = vtanh.pop %v1401
        %v1451 = vtanh.pop %v1405
        %v1452 = vtanh.pop %v1407
        %v1453 = vtanh.pop %v1411
        %v1454 = vtanh.pop %v1413
        %v1455 = vtanh.pop %v1417
        %v1456 = vtanh.pop %v1419
        %v1457 = vtanh.pop %v1423
        %v1458 = vtanh.pop %v1425
        %v1459 = vld [vmem:[%s7] sm:$0xff]
        %v1460 = vld [vmem:[%s7 + $0x8] sm:$0xff]
        %v1461 = vld [vmem:[%s7 + $0x10] sm:$0xff]
        %v1462 = vld [vmem:[%s7 + $0x18] sm:$0xff]
        %v1463 = vld [vmem:[%s7 + $0x20] sm:$0xff]
        %v1464 = vld [vmem:[%s7 + $0x28] sm:$0xff]
        %v1465 = vld [vmem:[%s7 + $0x30] sm:$0xff]
        %v1466 = vld [vmem:[%s7 + $0x38] sm:$0xff]
        %v1467 = vld [vmem:[%s7 + $0x40] sm:$0xff]
        %v1468 = vld [vmem:[%s7 + $0x48] sm:$0xff]
        %v1469 = vld [vmem:[%s7 + $0x50] sm:$0xff]
        %v1470 = vld [vmem:[%s7 + $0x58] sm:$0xff]
        %v1471 = vld [vmem:[%s7 + $0x60] sm:$0xff]
        %v1472 = vld [vmem:[%s7 + $0x68] sm:$0xff]
        %v1473 = vld [vmem:[%s7 + $0x70] sm:$0xff]
        %v1474 = vld [vmem:[%s7 + $0x78] sm:$0xff]
        %v1475 = vld [vmem:[%s7 + $0x80] sm:$0xff]
        %v1476 = vld [vmem:[%s7 + $0x88] sm:$0xff]
        %v1477 = vld [vmem:[%s7 + $0x90] sm:$0xff]
        %v1478 = vld [vmem:[%s7 + $0x98] sm:$0xff]
        %v1479 = vld [vmem:[%s7 + $0xa0] sm:$0xff]
        %v1480 = vld [vmem:[%s7 + $0xa8] sm:$0xff]
        %v1481 = vld [vmem:[%s7 + $0xb0] sm:$0xff]
        %v1482 = vld [vmem:[%s7 + $0xb8] sm:$0xff]
        %v1483 = vld [vmem:[%s7 + $0xc0] sm:$0xff]
        %v1484 = vld [vmem:[%s7 + $0xc8] sm:$0xff]
        %v1485 = vld [vmem:[%s7 + $0xd0] sm:$0xff]
        %v1486 = vld [vmem:[%s7 + $0xd8] sm:$0xff]
        %v1487 = vld [vmem:[%s7 + $0xe0] sm:$0xff]
        %v1488 = vld [vmem:[%s7 + $0xe8] sm:$0xff]
        %v1489 = vld [vmem:[%s7 + $0xf0] sm:$0xff]
        %v1490 = vld [vmem:[%s7 + $0xf8] sm:$0xff]
        %v1491 = vld [vmem:[%s8] sm:$0xff]
        %v1492 = vld [vmem:[%s8 + $0x8] sm:$0xff]
        %v1493 = vld [vmem:[%s8 + $0x10] sm:$0xff]
        %v1494 = vld [vmem:[%s8 + $0x18] sm:$0xff]
        %v1495 = vld [vmem:[%s8 + $0x20] sm:$0xff]
        %v1496 = vld [vmem:[%s8 + $0x28] sm:$0xff]
        %v1497 = vld [vmem:[%s8 + $0x30] sm:$0xff]
        %v1498 = vld [vmem:[%s8 + $0x38] sm:$0xff]
        %v1499 = vld [vmem:[%s8 + $0x40] sm:$0xff]
        %v1500 = vld [vmem:[%s8 + $0x48] sm:$0xff]
        %v1501 = vld [vmem:[%s8 + $0x50] sm:$0xff]
        %v1502 = vld [vmem:[%s8 + $0x58] sm:$0xff]
        %v1503 = vld [vmem:[%s8 + $0x60] sm:$0xff]
        %v1504 = vld [vmem:[%s8 + $0x68] sm:$0xff]
        %v1505 = vld [vmem:[%s8 + $0x70] sm:$0xff]
        %v1506 = vld [vmem:[%s8 + $0x78] sm:$0xff]
        %v1507 = vld [vmem:[%s8 + $0x80] sm:$0xff]
        %v1508 = vld [vmem:[%s8 + $0x88] sm:$0xff]
        %v1509 = vld [vmem:[%s8 + $0x90] sm:$0xff]
        %v1510 = vld [vmem:[%s8 + $0x98] sm:$0xff]
        %v1511 = vld [vmem:[%s8 + $0xa0] sm:$0xff]
        %v1512 = vld [vmem:[%s8 + $0xa8] sm:$0xff]
        %v1513 = vld [vmem:[%s8 + $0xb0] sm:$0xff]
        %v1514 = vld [vmem:[%s8 + $0xb8] sm:$0xff]
        %v1515 = vld [vmem:[%s8 + $0xc0] sm:$0xff]
        %v1516 = vld [vmem:[%s8 + $0xc8] sm:$0xff]
        %v1517 = vld [vmem:[%s8 + $0xd0] sm:$0xff]
        %v1518 = vld [vmem:[%s8 + $0xd8] sm:$0xff]
        %v1519 = vld [vmem:[%s8 + $0xe0] sm:$0xff]
        %v1520 = vld [vmem:[%s8 + $0xe8] sm:$0xff]
        %v1521 = vld [vmem:[%s8 + $0xf0] sm:$0xff]
        %v1522 = vld [vmem:[%s8 + $0xf8] sm:$0xff]
        %1524 = vset.pattern.permute.xlu0 0
        %1525 = vperm.xlu0 %1524, %v1491
        %v1526 = vpop.permute.xlu0 %1525
        %1529 = vset.pattern.permute.xlu0 0
        %1530 = vperm.xlu0 %1529, %v1492
        %v1531 = vpop.permute.xlu0 %1530
        %1534 = vset.pattern.permute.xlu0 0
        %1535 = vperm.xlu0 %1534, %v1493
        %v1536 = vpop.permute.xlu0 %1535
        %1539 = vset.pattern.permute.xlu0 0
        %1540 = vperm.xlu0 %1539, %v1494
        %v1541 = vpop.permute.xlu0 %1540
        %1544 = vset.pattern.permute.xlu0 0
        %1545 = vperm.xlu0 %1544, %v1495
        %v1546 = vpop.permute.xlu0 %1545
        %1549 = vset.pattern.permute.xlu0 0
        %1550 = vperm.xlu0 %1549, %v1496
        %v1551 = vpop.permute.xlu0 %1550
        %1554 = vset.pattern.permute.xlu0 0
        %1555 = vperm.xlu0 %1554, %v1497
        %v1556 = vpop.permute.xlu0 %1555
        %1559 = vset.pattern.permute.xlu0 0
        %1560 = vperm.xlu0 %1559, %v1498
        %v1561 = vpop.permute.xlu0 %1560
        %1564 = vset.pattern.permute.xlu0 0
        %1565 = vperm.xlu0 %1564, %v1499
        %v1566 = vpop.permute.xlu0 %1565
        %1569 = vset.pattern.permute.xlu0 0
        %1570 = vperm.xlu0 %1569, %v1500
        %v1571 = vpop.permute.xlu0 %1570
        %1574 = vset.pattern.permute.xlu0 0
        %1575 = vperm.xlu0 %1574, %v1501
        %v1576 = vpop.permute.xlu0 %1575
        %1579 = vset.pattern.permute.xlu0 0
        %1580 = vperm.xlu0 %1579, %v1502
        %v1581 = vpop.permute.xlu0 %1580
        %1584 = vset.pattern.permute.xlu0 0
        %1585 = vperm.xlu0 %1584, %v1503
        %v1586 = vpop.permute.xlu0 %1585
        %1589 = vset.pattern.permute.xlu0 0
        %1590 = vperm.xlu0 %1589, %v1504
        %v1591 = vpop.permute.xlu0 %1590
        %1594 = vset.pattern.permute.xlu0 0
        %1595 = vperm.xlu0 %1594, %v1505
        %v1596 = vpop.permute.xlu0 %1595
        %1599 = vset.pattern.permute.xlu0 0
        %1600 = vperm.xlu0 %1599, %v1506
        %v1601 = vpop.permute.xlu0 %1600
        %1604 = vset.pattern.permute.xlu0 0
        %1605 = vperm.xlu0 %1604, %v1507
        %v1606 = vpop.permute.xlu0 %1605
        %1609 = vset.pattern.permute.xlu0 0
        %1610 = vperm.xlu0 %1609, %v1508
        %v1611 = vpop.permute.xlu0 %1610
        %1614 = vset.pattern.permute.xlu0 0
        %1615 = vperm.xlu0 %1614, %v1509
        %v1616 = vpop.permute.xlu0 %1615
        %1619 = vset.pattern.permute.xlu0 0
        %1620 = vperm.xlu0 %1619, %v1510
        %v1621 = vpop.permute.xlu0 %1620
        %1624 = vset.pattern.permute.xlu0 0
        %1625 = vperm.xlu0 %1624, %v1511
        %v1626 = vpop.permute.xlu0 %1625
        %1629 = vset.pattern.permute.xlu0 0
        %1630 = vperm.xlu0 %1629, %v1512
        %v1631 = vpop.permute.xlu0 %1630
        %1634 = vset.pattern.permute.xlu0 0
        %1635 = vperm.xlu0 %1634, %v1513
        %v1636 = vpop.permute.xlu0 %1635
        %1639 = vset.pattern.permute.xlu0 0
        %1640 = vperm.xlu0 %1639, %v1514
        %v1641 = vpop.permute.xlu0 %1640
        %1644 = vset.pattern.permute.xlu0 0
        %1645 = vperm.xlu0 %1644, %v1515
        %v1646 = vpop.permute.xlu0 %1645
        %1649 = vset.pattern.permute.xlu0 0
        %1650 = vperm.xlu0 %1649, %v1516
        %v1651 = vpop.permute.xlu0 %1650
        %1654 = vset.pattern.permute.xlu0 0
        %1655 = vperm.xlu0 %1654, %v1517
        %v1656 = vpop.permute.xlu0 %1655
        %1659 = vset.pattern.permute.xlu0 0
        %1660 = vperm.xlu0 %1659, %v1518
        %v1661 = vpop.permute.xlu0 %1660
        %1664 = vset.pattern.permute.xlu0 0
        %1665 = vperm.xlu0 %1664, %v1519
        %v1666 = vpop.permute.xlu0 %1665
        %1669 = vset.pattern.permute.xlu0 0
        %1670 = vperm.xlu0 %1669, %v1520
        %v1671 = vpop.permute.xlu0 %1670
        %1674 = vset.pattern.permute.xlu0 0
        %1675 = vperm.xlu0 %1674, %v1521
        %v1676 = vpop.permute.xlu0 %1675
        %1679 = vset.pattern.permute.xlu0 0
        %1680 = vperm.xlu0 %1679, %v1522
        %v1681 = vpop.permute.xlu0 %1680
        %1683 = vmatprep.subr.mxu0 %v1428
        %1684 = vmatpush1.msra.mxu0 %v1427
        %1685 = vmatprep.subr.mxu0 %v1430
        %1686 = vmatpush1.msra.mxu0 %v1429
        %1687 = vmatprep.subr.mxu0 %v1432
        %1688 = vmatpush1.msra.mxu0 %v1431
        %1689 = vmatprep.subr.mxu0 %v1434
        %1690 = vmatpush1.msra.mxu0 %v1433
        %1691 = vmatprep.subr.mxu0 %v1436
        %1692 = vmatpush1.msra.mxu0 %v1435
        %1693 = vmatprep.subr.mxu0 %v1438
        %1694 = vmatpush1.msra.mxu0 %v1437
        %1695 = vmatprep.subr.mxu0 %v1440
        %1696 = vmatpush1.msra.mxu0 %v1439
        %1697 = vmatprep.subr.mxu0 %v1442
        %1698 = vmatpush1.msra.mxu0 %v1441
        %1699 = vmatprep.subr.mxu0 %v1444
        %1700 = vmatpush1.msra.mxu0 %v1443
        %1701 = vmatprep.subr.mxu0 %v1446
        %1702 = vmatpush1.msra.mxu0 %v1445
        %1703 = vmatprep.subr.mxu0 %v1448
        %1704 = vmatpush1.msra.mxu0 %v1447
        %1705 = vmatprep.subr.mxu0 %v1450
        %1706 = vmatpush1.msra.mxu0 %v1449
        %1707 = vmatprep.subr.mxu0 %v1452
        %1708 = vmatpush1.msra.mxu0 %v1451
        %1709 = vmatprep.subr.mxu0 %v1454
        %1710 = vmatpush1.msra.mxu0 %v1453
        %1711 = vmatprep.subr.mxu0 %v1456
        %1712 = vmatpush1.msra.mxu0 %v1455
        %1713 = vmatprep.subr.mxu0 %v1458
        %1714 = vmatpush1.msra.mxu0 %v1457
        %1715 = vmatprep.subr.mxu0 0.0
        %1716 = vmatpush1.msra.mxu0 0.0
        %1717 = vmatprep.subr.mxu0 0.0
        %1718 = vmatpush1.msra.mxu0 0.0
        %1719 = vmatprep.subr.mxu0 0.0
        %1720 = vmatpush1.msra.mxu0 0.0
        %1721 = vmatprep.subr.mxu0 0.0
        %1722 = vmatpush1.msra.mxu0 0.0
        %1723 = vmatprep.subr.mxu0 0.0
        %1724 = vmatpush1.msra.mxu0 0.0
        %1725 = vmatprep.subr.mxu0 0.0
        %1726 = vmatpush1.msra.mxu0 0.0
        %1727 = vmatprep.subr.mxu0 0.0
        %1728 = vmatpush1.msra.mxu0 0.0
        %1729 = vmatprep.subr.mxu0 0.0
        %1730 = vmatpush1.msra.mxu0 0.0
        %1731 = vmatprep.subr.mxu0 0.0
        %1732 = vmatpush1.msra.mxu0 0.0
        %1733 = vmatprep.subr.mxu0 0.0
        %1734 = vmatpush1.msra.mxu0 0.0
        %1735 = vmatprep.subr.mxu0 0.0
        %1736 = vmatpush1.msra.mxu0 0.0
        %1737 = vmatprep.subr.mxu0 0.0
        %1738 = vmatpush1.msra.mxu0 0.0
        %1739 = vmatprep.subr.mxu0 0.0
        %1740 = vmatpush1.msra.mxu0 0.0
        %1741 = vmatprep.subr.mxu0 0.0
        %1742 = vmatpush1.msra.mxu0 0.0
        %1743 = vmatprep.subr.mxu0 0.0
        %1744 = vmatpush1.msra.mxu0 0.0
        %1745 = vmatprep.subr.mxu0 0.0
        %1746 = vmatpush1.msra.mxu0 0.0
        %1747 = vmatprep.mubr.f32.mxu0 0.0
        %1748 = vmatmul.mubr.f32.gmra.mrb[0].mxu0 %v1459
        %v1749 = vpop.f32.mrb[0].mxu0
        %v1750 = vadd.f32 %v1526, %v1749
        %v1751 = vpop.f32.mrb[0].mxu0
        %v1752 = vadd.f32 %v1526, %v1751
        %1753 = vmatprep.mubr.f32.mxu0 0.0
        %1754 = vmatmul.mubr.f32.gmra.mrb[0].mxu0 %v1460
        %v1755 = vpop.f32.mrb[0].mxu0
        %v1756 = vadd.f32 %v1531, %v1755
        %v1757 = vpop.f32.mrb[0].mxu0
        %v1758 = vadd.f32 %v1531, %v1757
        %1759 = vmatprep.mubr.f32.mxu0 0.0
        %1760 = vmatmul.mubr.f32.gmra.mrb[0].mxu0 %v1461
        %v1761 = vpop.f32.mrb[0].mxu0
        %v1762 = vadd.f32 %v1536, %v1761
        %v1763 = vpop.f32.mrb[0].mxu0
        %v1764 = vadd.f32 %v1536, %v1763
        %1765 = vmatprep.mubr.f32.mxu0 0.0
        %1766 = vmatmul.mubr.f32.gmra.mrb[0].mxu0 %v1462
        %v1767 = vpop.f32.mrb[0].mxu0
        %v1768 = vadd.f32 %v1541, %v1767
        %v1769 = vpop.f32.mrb[0].mxu0
        %v1770 = vadd.f32 %v1541, %v1769
        %1771 = vmatprep.mubr.f32.mxu0 0.0
        %1772 = vmatmul.mubr.f32.gmra.mrb[0].mxu0 %v1463
        %v1773 = vpop.f32.mrb[0].mxu0
        %v1774 = vadd.f32 %v1546, %v1773
        %v1775 = vpop.f32.mrb[0].mxu0
        %v1776 = vadd.f32 %v1546, %v1775
        %1777 = vmatprep.mubr.f32.mxu0 0.0
        %1778 = vmatmul.mubr.f32.gmra.mrb[0].mxu0 %v1464
        %v1779 = vpop.f32.mrb[0].mxu0
        %v1780 = vadd.f32 %v1551, %v1779
        %v1781 = vpop.f32.mrb[0].mxu0
        %v1782 = vadd.f32 %v1551, %v1781
        %1783 = vmatprep.mubr.f32.mxu0 0.0
        %1784 = vmatmul.mubr.f32.gmra.mrb[0].mxu0 %v1465
        %v1785 = vpop.f32.mrb[0].mxu0
        %v1786 = vadd.f32 %v1556, %v1785
        %v1787 = vpop.f32.mrb[0].mxu0
        %v1788 = vadd.f32 %v1556, %v1787
        %1789 = vmatprep.mubr.f32.mxu0 0.0
        %1790 = vmatmul.mubr.f32.gmra.mrb[0].mxu0 %v1466
        %v1791 = vpop.f32.mrb[0].mxu0
        %v1792 = vadd.f32 %v1561, %v1791
        %v1793 = vpop.f32.mrb[0].mxu0
        %v1794 = vadd.f32 %v1561, %v1793
        %1795 = vmatprep.mubr.f32.mxu0 0.0
        %1796 = vmatmul.mubr.f32.gmra.mrb[0].mxu0 %v1467
        %v1797 = vpop.f32.mrb[0].mxu0
        %v1798 = vadd.f32 %v1566, %v1797
        %v1799 = vpop.f32.mrb[0].mxu0
        %v1800 = vadd.f32 %v1566, %v1799
        %1801 = vmatprep.mubr.f32.mxu0 0.0
        %1802 = vmatmul.mubr.f32.gmra.mrb[0].mxu0 %v1468
        %v1803 = vpop.f32.mrb[0].mxu0
        %v1804 = vadd.f32 %v1571, %v1803
        %v1805 = vpop.f32.mrb[0].mxu0
        %v1806 = vadd.f32 %v1571, %v1805
        %1807 = vmatprep.mubr.f32.mxu0 0.0
        %1808 = vmatmul.mubr.f32.gmra.mrb[0].mxu0 %v1469
        %v1809 = vpop.f32.mrb[0].mxu0
        %v1810 = vadd.f32 %v1576, %v1809
        %v1811 = vpop.f32.mrb[0].mxu0
        %v1812 = vadd.f32 %v1576, %v1811
        %1813 = vmatprep.mubr.f32.mxu0 0.0
        %1814 = vmatmul.mubr.f32.gmra.mrb[0].mxu0 %v1470
        %v1815 = vpop.f32.mrb[0].mxu0
        %v1816 = vadd.f32 %v1581, %v1815
        %v1817 = vpop.f32.mrb[0].mxu0
        %v1818 = vadd.f32 %v1581, %v1817
        %1819 = vmatprep.mubr.f32.mxu0 0.0
        %1820 = vmatmul.mubr.f32.gmra.mrb[0].mxu0 %v1471
        %v1821 = vpop.f32.mrb[0].mxu0
        %v1822 = vadd.f32 %v1586, %v1821
        %v1823 = vpop.f32.mrb[0].mxu0
        %v1824 = vadd.f32 %v1586, %v1823
        %1825 = vmatprep.mubr.f32.mxu0 0.0
        %1826 = vmatmul.mubr.f32.gmra.mrb[0].mxu0 %v1472
        %v1827 = vpop.f32.mrb[0].mxu0
        %v1828 = vadd.f32 %v1591, %v1827
        %v1829 = vpop.f32.mrb[0].mxu0
        %v1830 = vadd.f32 %v1591, %v1829
        %1831 = vmatprep.mubr.f32.mxu0 0.0
        %1832 = vmatmul.mubr.f32.gmra.mrb[0].mxu0 %v1473
        %v1833 = vpop.f32.mrb[0].mxu0
        %v1834 = vadd.f32 %v1596, %v1833
        %v1835 = vpop.f32.mrb[0].mxu0
        %v1836 = vadd.f32 %v1596, %v1835
        %1837 = vmatprep.mubr.f32.mxu0 0.0
        %1838 = vmatmul.mubr.f32.gmra.mrb[0].mxu0 %v1474
        %v1839 = vpop.f32.mrb[0].mxu0
        %v1840 = vadd.f32 %v1601, %v1839
        %v1841 = vpop.f32.mrb[0].mxu0
        %v1842 = vadd.f32 %v1601, %v1841
        %1843 = vmatprep.mubr.f32.mxu0 0.0
        %1844 = vmatmul.mubr.f32.gmra.mrb[0].mxu0 %v1475
        %v1845 = vpop.f32.mrb[0].mxu0
        %v1846 = vadd.f32 %v1606, %v1845
        %v1847 = vpop.f32.mrb[0].mxu0
        %v1848 = vadd.f32 %v1606, %v1847
        %1849 = vmatprep.mubr.f32.mxu0 0.0
        %1850 = vmatmul.mubr.f32.gmra.mrb[0].mxu0 %v1476
        %v1851 = vpop.f32.mrb[0].mxu0
        %v1852 = vadd.f32 %v1611, %v1851
        %v1853 = vpop.f32.mrb[0].mxu0
        %v1854 = vadd.f32 %v1611, %v1853
        %1855 = vmatprep.mubr.f32.mxu0 0.0
        %1856 = vmatmul.mubr.f32.gmra.mrb[0].mxu0 %v1477
        %v1857 = vpop.f32.mrb[0].mxu0
        %v1858 = vadd.f32 %v1616, %v1857
        %v1859 = vpop.f32.mrb[0].mxu0
        %v1860 = vadd.f32 %v1616, %v1859
        %1861 = vmatprep.mubr.f32.mxu0 0.0
        %1862 = vmatmul.mubr.f32.gmra.mrb[0].mxu0 %v1478
        %v1863 = vpop.f32.mrb[0].mxu0
        %v1864 = vadd.f32 %v1621, %v1863
        %v1865 = vpop.f32.mrb[0].mxu0
        %v1866 = vadd.f32 %v1621, %v1865
        %1867 = vmatprep.mubr.f32.mxu0 0.0
        %1868 = vmatmul.mubr.f32.gmra.mrb[0].mxu0 %v1479
        %v1869 = vpop.f32.mrb[0].mxu0
        %v1870 = vadd.f32 %v1626, %v1869
        %v1871 = vpop.f32.mrb[0].mxu0
        %v1872 = vadd.f32 %v1626, %v1871
        %1873 = vmatprep.mubr.f32.mxu0 0.0
        %1874 = vmatmul.mubr.f32.gmra.mrb[0].mxu0 %v1480
        %v1875 = vpop.f32.mrb[0].mxu0
        %v1876 = vadd.f32 %v1631, %v1875
        %v1877 = vpop.f32.mrb[0].mxu0
        %v1878 = vadd.f32 %v1631, %v1877
        %1879 = vmatprep.mubr.f32.mxu0 0.0
        %1880 = vmatmul.mubr.f32.gmra.mrb[0].mxu0 %v1481
        %v1881 = vpop.f32.mrb[0].mxu0
        %v1882 = vadd.f32 %v1636, %v1881
        %v1883 = vpop.f32.mrb[0].mxu0
        %v1884 = vadd.f32 %v1636, %v1883
        %1885 = vmatprep.mubr.f32.mxu0 0.0
        %1886 = vmatmul.mubr.f32.gmra.mrb[0].mxu0 %v1482
        %v1887 = vpop.f32.mrb[0].mxu0
        %v1888 = vadd.f32 %v1641, %v1887
        %v1889 = vpop.f32.mrb[0].mxu0
        %v1890 = vadd.f32 %v1641, %v1889
        %1891 = vmatprep.mubr.f32.mxu0 0.0
        %1892 = vmatmul.mubr.f32.gmra.mrb[0].mxu0 %v1483
        %v1893 = vpop.f32.mrb[0].mxu0
        %v1894 = vadd.f32 %v1646, %v1893
        %v1895 = vpop.f32.mrb[0].mxu0
        %v1896 = vadd.f32 %v1646, %v1895
        %1897 = vmatprep.mubr.f32.mxu0 0.0
        %1898 = vmatmul.mubr.f32.gmra.mrb[0].mxu0 %v1484
        %v1899 = vpop.f32.mrb[0].mxu0
        %v1900 = vadd.f32 %v1651, %v1899
        %v1901 = vpop.f32.mrb[0].mxu0
        %v1902 = vadd.f32 %v1651, %v1901
        %1903 = vmatprep.mubr.f32.mxu0 0.0
        %1904 = vmatmul.mubr.f32.gmra.mrb[0].mxu0 %v1485
        %v1905 = vpop.f32.mrb[0].mxu0
        %v1906 = vadd.f32 %v1656, %v1905
        %v1907 = vpop.f32.mrb[0].mxu0
        %v1908 = vadd.f32 %v1656, %v1907
        %1909 = vmatprep.mubr.f32.mxu0 0.0
        %1910 = vmatmul.mubr.f32.gmra.mrb[0].mxu0 %v1486
        %v1911 = vpop.f32.mrb[0].mxu0
        %v1912 = vadd.f32 %v1661, %v1911
        %v1913 = vpop.f32.mrb[0].mxu0
        %v1914 = vadd.f32 %v1661, %v1913
        %1915 = vmatprep.mubr.f32.mxu0 0.0
        %1916 = vmatmul.mubr.f32.gmra.mrb[0].mxu0 %v1487
        %v1917 = vpop.f32.mrb[0].mxu0
        %v1918 = vadd.f32 %v1666, %v1917
        %v1919 = vpop.f32.mrb[0].mxu0
        %v1920 = vadd.f32 %v1666, %v1919
        %1921 = vmatprep.mubr.f32.mxu0 0.0
        %1922 = vmatmul.mubr.f32.gmra.mrb[0].mxu0 %v1488
        %v1923 = vpop.f32.mrb[0].mxu0
        %v1924 = vadd.f32 %v1671, %v1923
        %v1925 = vpop.f32.mrb[0].mxu0
        %v1926 = vadd.f32 %v1671, %v1925
        %1927 = vmatprep.mubr.f32.mxu0 0.0
        %1928 = vmatmul.mubr.f32.gmra.mrb[0].mxu0 %v1489
        %v1929 = vpop.f32.mrb[0].mxu0
        %v1930 = vadd.f32 %v1676, %v1929
        %v1931 = vpop.f32.mrb[0].mxu0
        %v1932 = vadd.f32 %v1676, %v1931
        %1933 = vmatprep.mubr.f32.mxu0 0.0
        %1934 = vmatmul.mubr.f32.gmra.mrb[0].mxu0 %v1490
        %v1935 = vpop.f32.mrb[0].mxu0
        %v1936 = vadd.f32 %v1681, %v1935
        %v1937 = vpop.f32.mrb[0].mxu0
        %v1938 = vadd.f32 %v1681, %v1937
        %1939 = vdwg.mxu0
        %v1940 = vtanh.pop %v1750
        %v1941 = vtanh.pop %v1752
        %v1942 = vtanh.pop %v1756
        %v1943 = vtanh.pop %v1758
        %v1944 = vtanh.pop %v1762
        %v1945 = vtanh.pop %v1764
        %v1946 = vtanh.pop %v1768
        %v1947 = vtanh.pop %v1770
        %v1948 = vtanh.pop %v1774
        %v1949 = vtanh.pop %v1776
        %v1950 = vtanh.pop %v1780
        %v1951 = vtanh.pop %v1782
        %v1952 = vtanh.pop %v1786
        %v1953 = vtanh.pop %v1788
        %v1954 = vtanh.pop %v1792
        %v1955 = vtanh.pop %v1794
        %v1956 = vtanh.pop %v1798
        %v1957 = vtanh.pop %v1800
        %v1958 = vtanh.pop %v1804
        %v1959 = vtanh.pop %v1806
        %v1960 = vtanh.pop %v1810
        %v1961 = vtanh.pop %v1812
        %v1962 = vtanh.pop %v1816
        %v1963 = vtanh.pop %v1818
        %v1964 = vtanh.pop %v1822
        %v1965 = vtanh.pop %v1824
        %v1966 = vtanh.pop %v1828
        %v1967 = vtanh.pop %v1830
        %v1968 = vtanh.pop %v1834
        %v1969 = vtanh.pop %v1836
        %v1970 = vtanh.pop %v1840
        %v1971 = vtanh.pop %v1842
        %v1972 = vtanh.pop %v1846
        %v1973 = vtanh.pop %v1848
        %v1974 = vtanh.pop %v1852
        %v1975 = vtanh.pop %v1854
        %v1976 = vtanh.pop %v1858
        %v1977 = vtanh.pop %v1860
        %v1978 = vtanh.pop %v1864
        %v1979 = vtanh.pop %v1866
        %v1980 = vtanh.pop %v1870
        %v1981 = vtanh.pop %v1872
        %v1982 = vtanh.pop %v1876
        %v1983 = vtanh.pop %v1878
        %v1984 = vtanh.pop %v1882
        %v1985 = vtanh.pop %v1884
        %v1986 = vtanh.pop %v1888
        %v1987 = vtanh.pop %v1890
        %v1988 = vtanh.pop %v1894
        %v1989 = vtanh.pop %v1896
        %v1990 = vtanh.pop %v1900
        %v1991 = vtanh.pop %v1902
        %v1992 = vtanh.pop %v1906
        %v1993 = vtanh.pop %v1908
        %v1994 = vtanh.pop %v1912
        %v1995 = vtanh.pop %v1914
        %v1996 = vtanh.pop %v1918
        %v1997 = vtanh.pop %v1920
        %v1998 = vtanh.pop %v1924
        %v1999 = vtanh.pop %v1926
        %v2000 = vtanh.pop %v1930
        %v2001 = vtanh.pop %v1932
        %v2002 = vtanh.pop %v1936
        %v2003 = vtanh.pop %v1938
        %v2004 = vld [vmem:[%s9] sm:$0xff]
        %v2005 = vld [vmem:[%s9 + $0x8] sm:$0xff]
        %v2006 = vld [vmem:[%s9 + $0x10] sm:$0xff]
        %v2007 = vld [vmem:[%s9 + $0x18] sm:$0xff]
        %v2008 = vld [vmem:[%s9 + $0x20] sm:$0xff]
        %v2009 = vld [vmem:[%s9 + $0x28] sm:$0xff]
        %v2010 = vld [vmem:[%s9 + $0x30] sm:$0xff]
        %v2011 = vld [vmem:[%s9 + $0x38] sm:$0xff]
        %v2012 = vld [vmem:[%s9 + $0x40] sm:$0xff]
        %v2013 = vld [vmem:[%s9 + $0x48] sm:$0xff]
        %v2014 = vld [vmem:[%s9 + $0x50] sm:$0xff]
        %v2015 = vld [vmem:[%s9 + $0x58] sm:$0xff]
        %v2016 = vld [vmem:[%s9 + $0x60] sm:$0xff]
        %v2017 = vld [vmem:[%s9 + $0x68] sm:$0xff]
        %v2018 = vld [vmem:[%s9 + $0x70] sm:$0xff]
        %v2019 = vld [vmem:[%s9 + $0x78] sm:$0xff]
        %v2020 = vld [vmem:[%s9 + $0x80] sm:$0xff]
        %v2021 = vld [vmem:[%s9 + $0x88] sm:$0xff]
        %v2022 = vld [vmem:[%s9 + $0x90] sm:$0xff]
        %v2023 = vld [vmem:[%s9 + $0x98] sm:$0xff]
        %v2024 = vld [vmem:[%s9 + $0xa0] sm:$0xff]
        %v2025 = vld [vmem:[%s9 + $0xa8] sm:$0xff]
        %v2026 = vld [vmem:[%s9 + $0xb0] sm:$0xff]
        %v2027 = vld [vmem:[%s9 + $0xb8] sm:$0xff]
        %v2028 = vld [vmem:[%s9 + $0xc0] sm:$0xff]
        %v2029 = vld [vmem:[%s9 + $0xc8] sm:$0xff]
        %v2030 = vld [vmem:[%s9 + $0xd0] sm:$0xff]
        %v2031 = vld [vmem:[%s9 + $0xd8] sm:$0xff]
        %v2032 = vld [vmem:[%s9 + $0xe0] sm:$0xff]
        %v2033 = vld [vmem:[%s9 + $0xe8] sm:$0xff]
        %v2034 = vld [vmem:[%s9 + $0xf0] sm:$0xff]
        %v2035 = vld [vmem:[%s9 + $0xf8] sm:$0xff]
        %v2036 = vld [vmem:[%s10] sm:$0xff]
        %v2037 = vld [vmem:[%s10 + $0x8] sm:$0xff]
        %v2038 = vld [vmem:[%s10 + $0x10] sm:$0xff]
        %v2039 = vld [vmem:[%s10 + $0x18] sm:$0xff]
        %v2040 = vld [vmem:[%s10 + $0x20] sm:$0xff]
        %v2041 = vld [vmem:[%s10 + $0x28] sm:$0xff]
        %v2042 = vld [vmem:[%s10 + $0x30] sm:$0xff]
        %v2043 = vld [vmem:[%s10 + $0x38] sm:$0xff]
        %v2044 = vld [vmem:[%s10 + $0x40] sm:$0xff]
        %v2045 = vld [vmem:[%s10 + $0x48] sm:$0xff]
        %v2046 = vld [vmem:[%s10 + $0x50] sm:$0xff]
        %v2047 = vld [vmem:[%s10 + $0x58] sm:$0xff]
        %v2048 = vld [vmem:[%s10 + $0x60] sm:$0xff]
        %v2049 = vld [vmem:[%s10 + $0x68] sm:$0xff]
        %v2050 = vld [vmem:[%s10 + $0x70] sm:$0xff]
        %v2051 = vld [vmem:[%s10 + $0x78] sm:$0xff]
        %2053 = vset.pattern.permute.xlu0 0
        %2054 = vperm.xlu0 %2053, %v2036
        %v2055 = vpop.permute.xlu0 %2054
        %2058 = vset.pattern.permute.xlu0 0
        %2059 = vperm.xlu0 %2058, %v2037
        %v2060 = vpop.permute.xlu0 %2059
        %2063 = vset.pattern.permute.xlu0 0
        %2064 = vperm.xlu0 %2063, %v2038
        %v2065 = vpop.permute.xlu0 %2064
        %2068 = vset.pattern.permute.xlu0 0
        %2069 = vperm.xlu0 %2068, %v2039
        %v2070 = vpop.permute.xlu0 %2069
        %2073 = vset.pattern.permute.xlu0 0
        %2074 = vperm.xlu0 %2073, %v2040
        %v2075 = vpop.permute.xlu0 %2074
        %2078 = vset.pattern.permute.xlu0 0
        %2079 = vperm.xlu0 %2078, %v2041
        %v2080 = vpop.permute.xlu0 %2079
        %2083 = vset.pattern.permute.xlu0 0
        %2084 = vperm.xlu0 %2083, %v2042
        %v2085 = vpop.permute.xlu0 %2084
        %2088 = vset.pattern.permute.xlu0 0
        %2089 = vperm.xlu0 %2088, %v2043
        %v2090 = vpop.permute.xlu0 %2089
        %2093 = vset.pattern.permute.xlu0 0
        %2094 = vperm.xlu0 %2093, %v2044
        %v2095 = vpop.permute.xlu0 %2094
        %2098 = vset.pattern.permute.xlu0 0
        %2099 = vperm.xlu0 %2098, %v2045
        %v2100 = vpop.permute.xlu0 %2099
        %2103 = vset.pattern.permute.xlu0 0
        %2104 = vperm.xlu0 %2103, %v2046
        %v2105 = vpop.permute.xlu0 %2104
        %2108 = vset.pattern.permute.xlu0 0
        %2109 = vperm.xlu0 %2108, %v2047
        %v2110 = vpop.permute.xlu0 %2109
        %2113 = vset.pattern.permute.xlu0 0
        %2114 = vperm.xlu0 %2113, %v2048
        %v2115 = vpop.permute.xlu0 %2114
        %2118 = vset.pattern.permute.xlu0 0
        %2119 = vperm.xlu0 %2118, %v2049
        %v2120 = vpop.permute.xlu0 %2119
        %2123 = vset.pattern.permute.xlu0 0
        %2124 = vperm.xlu0 %2123, %v2050
        %v2125 = vpop.permute.xlu0 %2124
        %2128 = vset.pattern.permute.xlu0 0
        %2129 = vperm.xlu0 %2128, %v2051
        %v2130 = vpop.permute.xlu0 %2129
        %2132 = vmatprep.subr.mxu0 %v1941
        %2133 = vmatpush1.msra.mxu0 %v1940
        %2134 = vmatprep.subr.mxu0 %v1943
        %2135 = vmatpush1.msra.mxu0 %v1942
        %2136 = vmatprep.subr.mxu0 %v1945
        %2137 = vmatpush1.msra.mxu0 %v1944
        %2138 = vmatprep.subr.mxu0 %v1947
        %2139 = vmatpush1.msra.mxu0 %v1946
        %2140 = vmatprep.subr.mxu0 %v1949
        %2141 = vmatpush1.msra.mxu0 %v1948
        %2142 = vmatprep.subr.mxu0 %v1951
        %2143 = vmatpush1.msra.mxu0 %v1950
        %2144 = vmatprep.subr.mxu0 %v1953
        %2145 = vmatpush1.msra.mxu0 %v1952
        %2146 = vmatprep.subr.mxu0 %v1955
        %2147 = vmatpush1.msra.mxu0 %v1954
        %2148 = vmatprep.subr.mxu0 %v1957
        %2149 = vmatpush1.msra.mxu0 %v1956
        %2150 = vmatprep.subr.mxu0 %v1959
        %2151 = vmatpush1.msra.mxu0 %v1958
        %2152 = vmatprep.subr.mxu0 %v1961
        %2153 = vmatpush1.msra.mxu0 %v1960
        %2154 = vmatprep.subr.mxu0 %v1963
        %2155 = vmatpush1.msra.mxu0 %v1962
        %2156 = vmatprep.subr.mxu0 %v1965
        %2157 = vmatpush1.msra.mxu0 %v1964
        %2158 = vmatprep.subr.mxu0 %v1967
        %2159 = vmatpush1.msra.mxu0 %v1966
        %2160 = vmatprep.subr.mxu0 %v1969
        %2161 = vmatpush1.msra.mxu0 %v1968
        %2162 = vmatprep.subr.mxu0 %v1971
        %2163 = vmatpush1.msra.mxu0 %v1970
        %2164 = vmatprep.subr.mxu0 %v1973
        %2165 = vmatpush1.msra.mxu0 %v1972
        %2166 = vmatprep.subr.mxu0 %v1975
        %2167 = vmatpush1.msra.mxu0 %v1974
        %2168 = vmatprep.subr.mxu0 %v1977
        %2169 = vmatpush1.msra.mxu0 %v1976
        %2170 = vmatprep.subr.mxu0 %v1979
        %2171 = vmatpush1.msra.mxu0 %v1978
        %2172 = vmatprep.subr.mxu0 %v1981
        %2173 = vmatpush1.msra.mxu0 %v1980
        %2174 = vmatprep.subr.mxu0 %v1983
        %2175 = vmatpush1.msra.mxu0 %v1982
        %2176 = vmatprep.subr.mxu0 %v1985
        %2177 = vmatpush1.msra.mxu0 %v1984
        %2178 = vmatprep.subr.mxu0 %v1987
        %2179 = vmatpush1.msra.mxu0 %v1986
        %2180 = vmatprep.subr.mxu0 %v1989
        %2181 = vmatpush1.msra.mxu0 %v1988
        %2182 = vmatprep.subr.mxu0 %v1991
        %2183 = vmatpush1.msra.mxu0 %v1990
        %2184 = vmatprep.subr.mxu0 %v1993
        %2185 = vmatpush1.msra.mxu0 %v1992
        %2186 = vmatprep.subr.mxu0 %v1995
        %2187 = vmatpush1.msra.mxu0 %v1994
        %2188 = vmatprep.subr.mxu0 %v1997
        %2189 = vmatpush1.msra.mxu0 %v1996
        %2190 = vmatprep.subr.mxu0 %v1999
        %2191 = vmatpush1.msra.mxu0 %v1998
        %2192 = vmatprep.subr.mxu0 %v2001
        %2193 = vmatpush1.msra.mxu0 %v2000
        %2194 = vmatprep.subr.mxu0 %v2003
        %2195 = vmatpush1.msra.mxu0 %v2002
        %2196 = vmatprep.mubr.f32.mxu0 %v2005
        %2197 = vmatmul.mubr.f32.gmra.mrb[0].mxu0 %v2004
        %v2198 = vpop.f32.mrb[0].mxu0
        %v2199 = vadd.f32 %v2055, %v2198
        %v2200 = vpop.f32.mrb[0].mxu0
        %v2201 = vadd.f32 %v2055, %v2200
        %2202 = vmatprep.mubr.f32.mxu0 %v2007
        %2203 = vmatmul.mubr.f32.gmra.mrb[0].mxu0 %v2006
        %v2204 = vpop.f32.mrb[0].mxu0
        %v2205 = vadd.f32 %v2060, %v2204
        %v2206 = vpop.f32.mrb[0].mxu0
        %v2207 = vadd.f32 %v2060, %v2206
        %2208 = vmatprep.mubr.f32.mxu0 %v2009
        %2209 = vmatmul.mubr.f32.gmra.mrb[0].mxu0 %v2008
        %v2210 = vpop.f32.mrb[0].mxu0
        %v2211 = vadd.f32 %v2065, %v2210
        %v2212 = vpop.f32.mrb[0].mxu0
        %v2213 = vadd.f32 %v2065, %v2212
        %2214 = vmatprep.mubr.f32.mxu0 %v2011
        %2215 = vmatmul.mubr.f32.gmra.mrb[0].mxu0 %v2010
        %v2216 = vpop.f32.mrb[0].mxu0
        %v2217 = vadd.f32 %v2070, %v2216
        %v2218 = vpop.f32.mrb[0].mxu0
        %v2219 = vadd.f32 %v2070, %v2218
        %2220 = vmatprep.mubr.f32.mxu0 %v2013
        %2221 = vmatmul.mubr.f32.gmra.mrb[0].mxu0 %v2012
        %v2222 = vpop.f32.mrb[0].mxu0
        %v2223 = vadd.f32 %v2075, %v2222
        %v2224 = vpop.f32.mrb[0].mxu0
        %v2225 = vadd.f32 %v2075, %v2224
        %2226 = vmatprep.mubr.f32.mxu0 %v2015
        %2227 = vmatmul.mubr.f32.gmra.mrb[0].mxu0 %v2014
        %v2228 = vpop.f32.mrb[0].mxu0
        %v2229 = vadd.f32 %v2080, %v2228
        %v2230 = vpop.f32.mrb[0].mxu0
        %v2231 = vadd.f32 %v2080, %v2230
        %2232 = vmatprep.mubr.f32.mxu0 %v2017
        %2233 = vmatmul.mubr.f32.gmra.mrb[0].mxu0 %v2016
        %v2234 = vpop.f32.mrb[0].mxu0
        %v2235 = vadd.f32 %v2085, %v2234
        %v2236 = vpop.f32.mrb[0].mxu0
        %v2237 = vadd.f32 %v2085, %v2236
        %2238 = vmatprep.mubr.f32.mxu0 %v2019
        %2239 = vmatmul.mubr.f32.gmra.mrb[0].mxu0 %v2018
        %v2240 = vpop.f32.mrb[0].mxu0
        %v2241 = vadd.f32 %v2090, %v2240
        %v2242 = vpop.f32.mrb[0].mxu0
        %v2243 = vadd.f32 %v2090, %v2242
        %2244 = vmatprep.mubr.f32.mxu0 %v2021
        %2245 = vmatmul.mubr.f32.gmra.mrb[0].mxu0 %v2020
        %v2246 = vpop.f32.mrb[0].mxu0
        %v2247 = vadd.f32 %v2095, %v2246
        %v2248 = vpop.f32.mrb[0].mxu0
        %v2249 = vadd.f32 %v2095, %v2248
        %2250 = vmatprep.mubr.f32.mxu0 %v2023
        %2251 = vmatmul.mubr.f32.gmra.mrb[0].mxu0 %v2022
        %v2252 = vpop.f32.mrb[0].mxu0
        %v2253 = vadd.f32 %v2100, %v2252
        %v2254 = vpop.f32.mrb[0].mxu0
        %v2255 = vadd.f32 %v2100, %v2254
        %2256 = vmatprep.mubr.f32.mxu0 %v2025
        %2257 = vmatmul.mubr.f32.gmra.mrb[0].mxu0 %v2024
        %v2258 = vpop.f32.mrb[0].mxu0
        %v2259 = vadd.f32 %v2105, %v2258
        %v2260 = vpop.f32.mrb[0].mxu0
        %v2261 = vadd.f32 %v2105, %v2260
        %2262 = vmatprep.mubr.f32.mxu0 %v2027
        %2263 = vmatmul.mubr.f32.gmra.mrb[0].mxu0 %v2026
        %v2264 = vpop.f32.mrb[0].mxu0
        %v2265 = vadd.f32 %v2110, %v2264
        %v2266 = vpop.f32.mrb[0].mxu0
        %v2267 = vadd.f32 %v2110, %v2266
        %2268 = vmatprep.mubr.f32.mxu0 %v2029
        %2269 = vmatmul.mubr.f32.gmra.mrb[0].mxu0 %v2028
        %v2270 = vpop.f32.mrb[0].mxu0
        %v2271 = vadd.f32 %v2115, %v2270
        %v2272 = vpop.f32.mrb[0].mxu0
        %v2273 = vadd.f32 %v2115, %v2272
        %2274 = vmatprep.mubr.f32.mxu0 %v2031
        %2275 = vmatmul.mubr.f32.gmra.mrb[0].mxu0 %v2030
        %v2276 = vpop.f32.mrb[0].mxu0
        %v2277 = vadd.f32 %v2120, %v2276
        %v2278 = vpop.f32.mrb[0].mxu0
        %v2279 = vadd.f32 %v2120, %v2278
        %2280 = vmatprep.mubr.f32.mxu0 %v2033
        %2281 = vmatmul.mubr.f32.gmra.mrb[0].mxu0 %v2032
        %v2282 = vpop.f32.mrb[0].mxu0
        %v2283 = vadd.f32 %v2125, %v2282
        %v2284 = vpop.f32.mrb[0].mxu0
        %v2285 = vadd.f32 %v2125, %v2284
        %2286 = vmatprep.mubr.f32.mxu0 %v2035
        %2287 = vmatmul.mubr.f32.gmra.mrb[0].mxu0 %v2034
        %v2288 = vpop.f32.mrb[0].mxu0
        %v2289 = vadd.f32 %v2130, %v2288
        %v2290 = vpop.f32.mrb[0].mxu0
        %v2291 = vadd.f32 %v2130, %v2290
        %2292 = vdwg.mxu0
        %v2293 = vtanh.pop %v2199
        %v2294 = vtanh.pop %v2201
        %v2295 = vtanh.pop %v2205
        %v2296 = vtanh.pop %v2207
        %v2297 = vtanh.pop %v2211
        %v2298 = vtanh.pop %v2213
        %v2299 = vtanh.pop %v2217
        %v2300 = vtanh.pop %v2219
        %v2301 = vtanh.pop %v2223
        %v2302 = vtanh.pop %v2225
        %v2303 = vtanh.pop %v2229
        %v2304 = vtanh.pop %v2231
        %v2305 = vtanh.pop %v2235
        %v2306 = vtanh.pop %v2237
        %v2307 = vtanh.pop %v2241
        %v2308 = vtanh.pop %v2243
        %v2309 = vtanh.pop %v2247
        %v2310 = vtanh.pop %v2249
        %v2311 = vtanh.pop %v2253
        %v2312 = vtanh.pop %v2255
        %v2313 = vtanh.pop %v2259
        %v2314 = vtanh.pop %v2261
        %v2315 = vtanh.pop %v2265
        %v2316 = vtanh.pop %v2267
        %v2317 = vtanh.pop %v2271
        %v2318 = vtanh.pop %v2273
        %v2319 = vtanh.pop %v2277
        %v2320 = vtanh.pop %v2279
        %v2321 = vtanh.pop %v2283
        %v2322 = vtanh.pop %v2285
        %v2323 = vtanh.pop %v2289
        %v2324 = vtanh.pop %v2291
        %v2325 = vld [vmem:[%s11] sm:$0xff]
        %v2326 = vld [vmem:[%s11 + $0x8] sm:$0xff]
        %v2327 = vld [vmem:[%s11 + $0x10] sm:$0xff]
        %v2328 = vld [vmem:[%s11 + $0x18] sm:$0xff]
        %v2329 = vld [vmem:[%s11 + $0x20] sm:$0xff]
        %v2330 = vld [vmem:[%s11 + $0x28] sm:$0xff]
        %v2331 = vld [vmem:[%s11 + $0x30] sm:$0xff]
        %v2332 = vld [vmem:[%s11 + $0x38] sm:$0xff]
        %v2333 = vld [vmem:[%s11 + $0x40] sm:$0xff]
        %v2334 = vld [vmem:[%s11 + $0x48] sm:$0xff]
        %v2335 = vld [vmem:[%s11 + $0x50] sm:$0xff]
        %v2336 = vld [vmem:[%s11 + $0x58] sm:$0xff]
        %v2337 = vld [vmem:[%s11 + $0x60] sm:$0xff]
        %v2338 = vld [vmem:[%s11 + $0x68] sm:$0xff]
        %v2339 = vld [vmem:[%s11 + $0x70] sm:$0xff]
        %v2340 = vld [vmem:[%s11 + $0x78] sm:$0xff]
        %v2341 = vld [vmem:[%s12] sm:$0xff]
        %v2342 = vld [vmem:[%s12 + $0x8] sm:$0xff]
        %v2343 = vld [vmem:[%s12 + $0x10] sm:$0xff]
        %v2344 = vld [vmem:[%s12 + $0x18] sm:$0xff]
        %v2345 = vld [vmem:[%s12 + $0x20] sm:$0xff]
        %v2346 = vld [vmem:[%s12 + $0x28] sm:$0xff]
        %v2347 = vld [vmem:[%s12 + $0x30] sm:$0xff]
        %v2348 = vld [vmem:[%s12 + $0x38] sm:$0xff]
        %v2349 = vld [vmem:[%s12 + $0x40] sm:$0xff]
        %v2350 = vld [vmem:[%s12 + $0x48] sm:$0xff]
        %v2351 = vld [vmem:[%s12 + $0x50] sm:$0xff]
        %v2352 = vld [vmem:[%s12 + $0x58] sm:$0xff]
        %v2353 = vld [vmem:[%s12 + $0x60] sm:$0xff]
        %v2354 = vld [vmem:[%s12 + $0x68] sm:$0xff]
        %v2355 = vld [vmem:[%s12 + $0x70] sm:$0xff]
        %v2356 = vld [vmem:[%s12 + $0x78] sm:$0xff]
        %2358 = vset.pattern.permute.xlu0 0
        %2359 = vperm.xlu0 %2358, %v2341
        %v2360 = vpop.permute.xlu0 %2359
        %2363 = vset.pattern.permute.xlu0 0
        %2364 = vperm.xlu0 %2363, %v2342
        %v2365 = vpop.permute.xlu0 %2364
        %2368 = vset.pattern.permute.xlu0 0
        %2369 = vperm.xlu0 %2368, %v2343
        %v2370 = vpop.permute.xlu0 %2369
        %2373 = vset.pattern.permute.xlu0 0
        %2374 = vperm.xlu0 %2373, %v2344
        %v2375 = vpop.permute.xlu0 %2374
        %2378 = vset.pattern.permute.xlu0 0
        %2379 = vperm.xlu0 %2378, %v2345
        %v2380 = vpop.permute.xlu0 %2379
        %2383 = vset.pattern.permute.xlu0 0
        %2384 = vperm.xlu0 %2383, %v2346
        %v2385 = vpop.permute.xlu0 %2384
        %2388 = vset.pattern.permute.xlu0 0
        %2389 = vperm.xlu0 %2388, %v2347
        %v2390 = vpop.permute.xlu0 %2389
        %2393 = vset.pattern.permute.xlu0 0
        %2394 = vperm.xlu0 %2393, %v2348
        %v2395 = vpop.permute.xlu0 %2394
        %2398 = vset.pattern.permute.xlu0 0
        %2399 = vperm.xlu0 %2398, %v2349
        %v2400 = vpop.permute.xlu0 %2399
        %2403 = vset.pattern.permute.xlu0 0
        %2404 = vperm.xlu0 %2403, %v2350
        %v2405 = vpop.permute.xlu0 %2404
        %2408 = vset.pattern.permute.xlu0 0
        %2409 = vperm.xlu0 %2408, %v2351
        %v2410 = vpop.permute.xlu0 %2409
        %2413 = vset.pattern.permute.xlu0 0
        %2414 = vperm.xlu0 %2413, %v2352
        %v2415 = vpop.permute.xlu0 %2414
        %2418 = vset.pattern.permute.xlu0 0
        %2419 = vperm.xlu0 %2418, %v2353
        %v2420 = vpop.permute.xlu0 %2419
        %2423 = vset.pattern.permute.xlu0 0
        %2424 = vperm.xlu0 %2423, %v2354
        %v2425 = vpop.permute.xlu0 %2424
        %2428 = vset.pattern.permute.xlu0 0
        %2429 = vperm.xlu0 %2428, %v2355
        %v2430 = vpop.permute.xlu0 %2429
        %2433 = vset.pattern.permute.xlu0 0
        %2434 = vperm.xlu0 %2433, %v2356
        %v2435 = vpop.permute.xlu0 %2434
        %2437 = vmatprep.subr.mxu0 %v2294
        %2438 = vmatpush1.msra.mxu0 %v2293
        %2439 = vmatprep.subr.mxu0 %v2296
        %2440 = vmatpush1.msra.mxu0 %v2295
        %2441 = vmatprep.subr.mxu0 %v2298
        %2442 = vmatpush1.msra.mxu0 %v2297
        %2443 = vmatprep.subr.mxu0 %v2300
        %2444 = vmatpush1.msra.mxu0 %v2299
        %2445 = vmatprep.subr.mxu0 %v2302
        %2446 = vmatpush1.msra.mxu0 %v2301
        %2447 = vmatprep.subr.mxu0 %v2304
        %2448 = vmatpush1.msra.mxu0 %v2303
        %2449 = vmatprep.subr.mxu0 %v2306
        %2450 = vmatpush1.msra.mxu0 %v2305
        %2451 = vmatprep.subr.mxu0 %v2308
        %2452 = vmatpush1.msra.mxu0 %v2307
        %2453 = vmatprep.subr.mxu0 %v2310
        %2454 = vmatpush1.msra.mxu0 %v2309
        %2455 = vmatprep.subr.mxu0 %v2312
        %2456 = vmatpush1.msra.mxu0 %v2311
        %2457 = vmatprep.subr.mxu0 %v2314
        %2458 = vmatpush1.msra.mxu0 %v2313
        %2459 = vmatprep.subr.mxu0 %v2316
        %2460 = vmatpush1.msra.mxu0 %v2315
        %2461 = vmatprep.subr.mxu0 %v2318
        %2462 = vmatpush1.msra.mxu0 %v2317
        %2463 = vmatprep.subr.mxu0 %v2320
        %2464 = vmatpush1.msra.mxu0 %v2319
        %2465 = vmatprep.subr.mxu0 %v2322
        %2466 = vmatpush1.msra.mxu0 %v2321
        %2467 = vmatprep.subr.mxu0 %v2324
        %2468 = vmatpush1.msra.mxu0 %v2323
        %2469 = vmatprep.subr.mxu0 0.0
        %2470 = vmatpush1.msra.mxu0 0.0
        %2471 = vmatprep.subr.mxu0 0.0
        %2472 = vmatpush1.msra.mxu0 0.0
        %2473 = vmatprep.subr.mxu0 0.0
        %2474 = vmatpush1.msra.mxu0 0.0
        %2475 = vmatprep.subr.mxu0 0.0
        %2476 = vmatpush1.msra.mxu0 0.0
        %2477 = vmatprep.subr.mxu0 0.0
        %2478 = vmatpush1.msra.mxu0 0.0
        %2479 = vmatprep.subr.mxu0 0.0
        %2480 = vmatpush1.msra.mxu0 0.0
        %2481 = vmatprep.subr.mxu0 0.0
        %2482 = vmatpush1.msra.mxu0 0.0
        %2483 = vmatprep.subr.mxu0 0.0
        %2484 = vmatpush1.msra.mxu0 0.0
        %2485 = vmatprep.subr.mxu0 0.0
        %2486 = vmatpush1.msra.mxu0 0.0
        %2487 = vmatprep.subr.mxu0 0.0
        %2488 = vmatpush1.msra.mxu0 0.0
        %2489 = vmatprep.subr.mxu0 0.0
        %2490 = vmatpush1.msra.mxu0 0.0
        %2491 = vmatprep.subr.mxu0 0.0
        %2492 = vmatpush1.msra.mxu0 0.0
        %2493 = vmatprep.subr.mxu0 0.0
        %2494 = vmatpush1.msra.mxu0 0.0
        %2495 = vmatprep.subr.mxu0 0.0
        %2496 = vmatpush1.msra.mxu0 0.0
        %2497 = vmatprep.subr.mxu0 0.0
        %2498 = vmatpush1.msra.mxu0 0.0
        %2499 = vmatprep.subr.mxu0 0.0
        %2500 = vmatpush1.msra.mxu0 0.0
        %2501 = vmatprep.mubr.f32.mxu0 0.0
        %2502 = vmatmul.mubr.f32.gmra.mrb[0].mxu0 %v2325
        %v2503 = vpop.f32.mrb[0].mxu0
        %v2504 = vadd.f32 %v2360, %v2503
        %v2505 = vpop.f32.mrb[0].mxu0
        %v2506 = vadd.f32 %v2360, %v2505
        %2507 = vmatprep.mubr.f32.mxu0 0.0
        %2508 = vmatmul.mubr.f32.gmra.mrb[0].mxu0 %v2326
        %v2509 = vpop.f32.mrb[0].mxu0
        %v2510 = vadd.f32 %v2365, %v2509
        %v2511 = vpop.f32.mrb[0].mxu0
        %v2512 = vadd.f32 %v2365, %v2511
        %2513 = vmatprep.mubr.f32.mxu0 0.0
        %2514 = vmatmul.mubr.f32.gmra.mrb[0].mxu0 %v2327
        %v2515 = vpop.f32.mrb[0].mxu0
        %v2516 = vadd.f32 %v2370, %v2515
        %v2517 = vpop.f32.mrb[0].mxu0
        %v2518 = vadd.f32 %v2370, %v2517
        %2519 = vmatprep.mubr.f32.mxu0 0.0
        %2520 = vmatmul.mubr.f32.gmra.mrb[0].mxu0 %v2328
        %v2521 = vpop.f32.mrb[0].mxu0
        %v2522 = vadd.f32 %v2375, %v2521
        %v2523 = vpop.f32.mrb[0].mxu0
        %v2524 = vadd.f32 %v2375, %v2523
        %2525 = vmatprep.mubr.f32.mxu0 0.0
        %2526 = vmatmul.mubr.f32.gmra.mrb[0].mxu0 %v2329
        %v2527 = vpop.f32.mrb[0].mxu0
        %v2528 = vadd.f32 %v2380, %v2527
        %v2529 = vpop.f32.mrb[0].mxu0
        %v2530 = vadd.f32 %v2380, %v2529
        %2531 = vmatprep.mubr.f32.mxu0 0.0
        %2532 = vmatmul.mubr.f32.gmra.mrb[0].mxu0 %v2330
        %v2533 = vpop.f32.mrb[0].mxu0
        %v2534 = vadd.f32 %v2385, %v2533
        %v2535 = vpop.f32.mrb[0].mxu0
        %v2536 = vadd.f32 %v2385, %v2535
        %2537 = vmatprep.mubr.f32.mxu0 0.0
        %2538 = vmatmul.mubr.f32.gmra.mrb[0].mxu0 %v2331
        %v2539 = vpop.f32.mrb[0].mxu0
        %v2540 = vadd.f32 %v2390, %v2539
        %v2541 = vpop.f32.mrb[0].mxu0
        %v2542 = vadd.f32 %v2390, %v2541
        %2543 = vmatprep.mubr.f32.mxu0 0.0
        %2544 = vmatmul.mubr.f32.gmra.mrb[0].mxu0 %v2332
        %v2545 = vpop.f32.mrb[0].mxu0
        %v2546 = vadd.f32 %v2395, %v2545
        %v2547 = vpop.f32.mrb[0].mxu0
        %v2548 = vadd.f32 %v2395, %v2547
        %2549 = vmatprep.mubr.f32.mxu0 0.0
        %2550 = vmatmul.mubr.f32.gmra.mrb[0].mxu0 %v2333
        %v2551 = vpop.f32.mrb[0].mxu0
        %v2552 = vadd.f32 %v2400, %v2551
        %v2553 = vpop.f32.mrb[0].mxu0
        %v2554 = vadd.f32 %v2400, %v2553
        %2555 = vmatprep.mubr.f32.mxu0 0.0
        %2556 = vmatmul.mubr.f32.gmra.mrb[0].mxu0 %v2334
        %v2557 = vpop.f32.mrb[0].mxu0
        %v2558 = vadd.f32 %v2405, %v2557
        %v2559 = vpop.f32.mrb[0].mxu0
        %v2560 = vadd.f32 %v2405, %v2559
        %2561 = vmatprep.mubr.f32.mxu0 0.0
        %2562 = vmatmul.mubr.f32.gmra.mrb[0].mxu0 %v2335
        %v2563 = vpop.f32.mrb[0].mxu0
        %v2564 = vadd.f32 %v2410, %v2563
        %v2565 = vpop.f32.mrb[0].mxu0
        %v2566 = vadd.f32 %v2410, %v2565
        %2567 = vmatprep.mubr.f32.mxu0 0.0
        %2568 = vmatmul.mubr.f32.gmra.mrb[0].mxu0 %v2336
        %v2569 = vpop.f32.mrb[0].mxu0
        %v2570 = vadd.f32 %v2415, %v2569
        %v2571 = vpop.f32.mrb[0].mxu0
        %v2572 = vadd.f32 %v2415, %v2571
        %2573 = vmatprep.mubr.f32.mxu0 0.0
        %2574 = vmatmul.mubr.f32.gmra.mrb[0].mxu0 %v2337
        %v2575 = vpop.f32.mrb[0].mxu0
        %v2576 = vadd.f32 %v2420, %v2575
        %v2577 = vpop.f32.mrb[0].mxu0
        %v2578 = vadd.f32 %v2420, %v2577
        %2579 = vmatprep.mubr.f32.mxu0 0.0
        %2580 = vmatmul.mubr.f32.gmra.mrb[0].mxu0 %v2338
        %v2581 = vpop.f32.mrb[0].mxu0
        %v2582 = vadd.f32 %v2425, %v2581
        %v2583 = vpop.f32.mrb[0].mxu0
        %v2584 = vadd.f32 %v2425, %v2583
        %2585 = vmatprep.mubr.f32.mxu0 0.0
        %2586 = vmatmul.mubr.f32.gmra.mrb[0].mxu0 %v2339
        %v2587 = vpop.f32.mrb[0].mxu0
        %v2588 = vadd.f32 %v2430, %v2587
        %v2589 = vpop.f32.mrb[0].mxu0
        %v2590 = vadd.f32 %v2430, %v2589
        %2591 = vmatprep.mubr.f32.mxu0 0.0
        %2592 = vmatmul.mubr.f32.gmra.mrb[0].mxu0 %v2340
        %v2593 = vpop.f32.mrb[0].mxu0
        %v2594 = vadd.f32 %v2435, %v2593
        %v2595 = vpop.f32.mrb[0].mxu0
        %v2596 = vadd.f32 %v2435, %v2595
        %2597 = vdwg.mxu0
        %v2598 = vtanh.pop %v2504
        %v2599 = vtanh.pop %v2506
        %v2600 = vtanh.pop %v2510
        %v2601 = vtanh.pop %v2512
        %v2602 = vtanh.pop %v2516
        %v2603 = vtanh.pop %v2518
        %v2604 = vtanh.pop %v2522
        %v2605 = vtanh.pop %v2524
        %v2606 = vtanh.pop %v2528
        %v2607 = vtanh.pop %v2530
        %v2608 = vtanh.pop %v2534
        %v2609 = vtanh.pop %v2536
        %v2610 = vtanh.pop %v2540
        %v2611 = vtanh.pop %v2542
        %v2612 = vtanh.pop %v2546
        %v2613 = vtanh.pop %v2548
        %v2614 = vtanh.pop %v2552
        %v2615 = vtanh.pop %v2554
        %v2616 = vtanh.pop %v2558
        %v2617 = vtanh.pop %v2560
        %v2618 = vtanh.pop %v2564
        %v2619 = vtanh.pop %v2566
        %v2620 = vtanh.pop %v2570
        %v2621 = vtanh.pop %v2572
        %v2622 = vtanh.pop %v2576
        %v2623 = vtanh.pop %v2578
        %v2624 = vtanh.pop %v2582
        %v2625 = vtanh.pop %v2584
        %v2626 = vtanh.pop %v2588
        %v2627 = vtanh.pop %v2590
        %v2628 = vtanh.pop %v2594
        %v2629 = vtanh.pop %v2596
        %v2630 = vld [vmem:[%s13] sm:$0xff]
        %v2631 = vld [vmem:[%s13 + $0x8] sm:$0xff]
        %v2632 = vld [vmem:[%s13 + $0x10] sm:$0xff]
        %v2633 = vld [vmem:[%s13 + $0x18] sm:$0xff]
        %v2634 = vld [vmem:[%s13 + $0x20] sm:$0xff]
        %v2635 = vld [vmem:[%s13 + $0x28] sm:$0xff]
        %v2636 = vld [vmem:[%s13 + $0x30] sm:$0xff]
        %v2637 = vld [vmem:[%s13 + $0x38] sm:$0xff]
        %v2638 = vld [vmem:[%s13 + $0x40] sm:$0xff]
        %v2639 = vld [vmem:[%s13 + $0x48] sm:$0xff]
        %v2640 = vld [vmem:[%s13 + $0x50] sm:$0xff]
        %v2641 = vld [vmem:[%s13 + $0x58] sm:$0xff]
        %v2642 = vld [vmem:[%s13 + $0x60] sm:$0xff]
        %v2643 = vld [vmem:[%s13 + $0x68] sm:$0xff]
        %v2644 = vld [vmem:[%s13 + $0x70] sm:$0xff]
        %v2645 = vld [vmem:[%s13 + $0x78] sm:$0xff]
        %v2646 = vld [vmem:[%s14] sm:$0xff]
        %v2647 = vld [vmem:[%s14 + $0x8] sm:$0xff]
        %v2648 = vld [vmem:[%s14 + $0x10] sm:$0xff]
        %v2649 = vld [vmem:[%s14 + $0x18] sm:$0xff]
        %v2650 = vld [vmem:[%s14 + $0x20] sm:$0xff]
        %v2651 = vld [vmem:[%s14 + $0x28] sm:$0xff]
        %v2652 = vld [vmem:[%s14 + $0x30] sm:$0xff]
        %v2653 = vld [vmem:[%s14 + $0x38] sm:$0xff]
        %v2654 = vld [vmem:[%s14 + $0x40] sm:$0xff]
        %v2655 = vld [vmem:[%s14 + $0x48] sm:$0xff]
        %v2656 = vld [vmem:[%s14 + $0x50] sm:$0xff]
        %v2657 = vld [vmem:[%s14 + $0x58] sm:$0xff]
        %v2658 = vld [vmem:[%s14 + $0x60] sm:$0xff]
        %v2659 = vld [vmem:[%s14 + $0x68] sm:$0xff]
        %v2660 = vld [vmem:[%s14 + $0x70] sm:$0xff]
        %v2661 = vld [vmem:[%s14 + $0x78] sm:$0xff]
        %2663 = vset.pattern.permute.xlu0 0
        %2664 = vperm.xlu0 %2663, %v2646
        %v2665 = vpop.permute.xlu0 %2664
        %2668 = vset.pattern.permute.xlu0 0
        %2669 = vperm.xlu0 %2668, %v2647
        %v2670 = vpop.permute.xlu0 %2669
        %2673 = vset.pattern.permute.xlu0 0
        %2674 = vperm.xlu0 %2673, %v2648
        %v2675 = vpop.permute.xlu0 %2674
        %2678 = vset.pattern.permute.xlu0 0
        %2679 = vperm.xlu0 %2678, %v2649
        %v2680 = vpop.permute.xlu0 %2679
        %2683 = vset.pattern.permute.xlu0 0
        %2684 = vperm.xlu0 %2683, %v2650
        %v2685 = vpop.permute.xlu0 %2684
        %2688 = vset.pattern.permute.xlu0 0
        %2689 = vperm.xlu0 %2688, %v2651
        %v2690 = vpop.permute.xlu0 %2689
        %2693 = vset.pattern.permute.xlu0 0
        %2694 = vperm.xlu0 %2693, %v2652
        %v2695 = vpop.permute.xlu0 %2694
        %2698 = vset.pattern.permute.xlu0 0
        %2699 = vperm.xlu0 %2698, %v2653
        %v2700 = vpop.permute.xlu0 %2699
        %2703 = vset.pattern.permute.xlu0 0
        %2704 = vperm.xlu0 %2703, %v2654
        %v2705 = vpop.permute.xlu0 %2704
        %2708 = vset.pattern.permute.xlu0 0
        %2709 = vperm.xlu0 %2708, %v2655
        %v2710 = vpop.permute.xlu0 %2709
        %2713 = vset.pattern.permute.xlu0 0
        %2714 = vperm.xlu0 %2713, %v2656
        %v2715 = vpop.permute.xlu0 %2714
        %2718 = vset.pattern.permute.xlu0 0
        %2719 = vperm.xlu0 %2718, %v2657
        %v2720 = vpop.permute.xlu0 %2719
        %2723 = vset.pattern.permute.xlu0 0
        %2724 = vperm.xlu0 %2723, %v2658
        %v2725 = vpop.permute.xlu0 %2724
        %2728 = vset.pattern.permute.xlu0 0
        %2729 = vperm.xlu0 %2728, %v2659
        %v2730 = vpop.permute.xlu0 %2729
        %2733 = vset.pattern.permute.xlu0 0
        %2734 = vperm.xlu0 %2733, %v2660
        %v2735 = vpop.permute.xlu0 %2734
        %2738 = vset.pattern.permute.xlu0 0
        %2739 = vperm.xlu0 %2738, %v2661
        %v2740 = vpop.permute.xlu0 %2739
        %2742 = vmatprep.subr.mxu0 %v2599
        %2743 = vmatpush1.msra.mxu0 %v2598
        %2744 = vmatprep.subr.mxu0 %v2601
        %2745 = vmatpush1.msra.mxu0 %v2600
        %2746 = vmatprep.subr.mxu0 %v2603
        %2747 = vmatpush1.msra.mxu0 %v2602
        %2748 = vmatprep.subr.mxu0 %v2605
        %2749 = vmatpush1.msra.mxu0 %v2604
        %2750 = vmatprep.subr.mxu0 %v2607
        %2751 = vmatpush1.msra.mxu0 %v2606
        %2752 = vmatprep.subr.mxu0 %v2609
        %2753 = vmatpush1.msra.mxu0 %v2608
        %2754 = vmatprep.subr.mxu0 %v2611
        %2755 = vmatpush1.msra.mxu0 %v2610
        %2756 = vmatprep.subr.mxu0 %v2613
        %2757 = vmatpush1.msra.mxu0 %v2612
        %2758 = vmatprep.subr.mxu0 %v2615
        %2759 = vmatpush1.msra.mxu0 %v2614
        %2760 = vmatprep.subr.mxu0 %v2617
        %2761 = vmatpush1.msra.mxu0 %v2616
        %2762 = vmatprep.subr.mxu0 %v2619
        %2763 = vmatpush1.msra.mxu0 %v2618
        %2764 = vmatprep.subr.mxu0 %v2621
        %2765 = vmatpush1.msra.mxu0 %v2620
        %2766 = vmatprep.subr.mxu0 %v2623
        %2767 = vmatpush1.msra.mxu0 %v2622
        %2768 = vmatprep.subr.mxu0 %v2625
        %2769 = vmatpush1.msra.mxu0 %v2624
        %2770 = vmatprep.subr.mxu0 %v2627
        %2771 = vmatpush1.msra.mxu0 %v2626
        %2772 = vmatprep.subr.mxu0 %v2629
        %2773 = vmatpush1.msra.mxu0 %v2628
        %2774 = vmatprep.subr.mxu0 0.0
        %2775 = vmatpush1.msra.mxu0 0.0
        %2776 = vmatprep.subr.mxu0 0.0
        %2777 = vmatpush1.msra.mxu0 0.0
        %2778 = vmatprep.subr.mxu0 0.0
        %2779 = vmatpush1.msra.mxu0 0.0
        %2780 = vmatprep.subr.mxu0 0.0
        %2781 = vmatpush1.msra.mxu0 0.0
        %2782 = vmatprep.subr.mxu0 0.0
        %2783 = vmatpush1.msra.mxu0 0.0
        %2784 = vmatprep.subr.mxu0 0.0
        %2785 = vmatpush1.msra.mxu0 0.0
        %2786 = vmatprep.subr.mxu0 0.0
        %2787 = vmatpush1.msra.mxu0 0.0
        %2788 = vmatprep.subr.mxu0 0.0
        %2789 = vmatpush1.msra.mxu0 0.0
        %2790 = vmatprep.subr.mxu0 0.0
        %2791 = vmatpush1.msra.mxu0 0.0
        %2792 = vmatprep.subr.mxu0 0.0
        %2793 = vmatpush1.msra.mxu0 0.0
        %2794 = vmatprep.subr.mxu0 0.0
        %2795 = vmatpush1.msra.mxu0 0.0
        %2796 = vmatprep.subr.mxu0 0.0
        %2797 = vmatpush1.msra.mxu0 0.0
        %2798 = vmatprep.subr.mxu0 0.0
        %2799 = vmatpush1.msra.mxu0 0.0
        %2800 = vmatprep.subr.mxu0 0.0
        %2801 = vmatpush1.msra.mxu0 0.0
        %2802 = vmatprep.subr.mxu0 0.0
        %2803 = vmatpush1.msra.mxu0 0.0
        %2804 = vmatprep.subr.mxu0 0.0
        %2805 = vmatpush1.msra.mxu0 0.0
        %2806 = vmatprep.mubr.f32.mxu0 0.0
        %2807 = vmatmul.mubr.f32.gmra.mrb[0].mxu0 %v2630
        %v2808 = vpop.f32.mrb[0].mxu0
        %v2809 = vadd.f32 %v2665, %v2808
        %v2810 = vpop.f32.mrb[0].mxu0
        %v2811 = vadd.f32 %v2665, %v2810
        %2812 = vmatprep.mubr.f32.mxu0 0.0
        %2813 = vmatmul.mubr.f32.gmra.mrb[0].mxu0 %v2631
        %v2814 = vpop.f32.mrb[0].mxu0
        %v2815 = vadd.f32 %v2670, %v2814
        %v2816 = vpop.f32.mrb[0].mxu0
        %v2817 = vadd.f32 %v2670, %v2816
        %2818 = vmatprep.mubr.f32.mxu0 0.0
        %2819 = vmatmul.mubr.f32.gmra.mrb[0].mxu0 %v2632
        %v2820 = vpop.f32.mrb[0].mxu0
        %v2821 = vadd.f32 %v2675, %v2820
        %v2822 = vpop.f32.mrb[0].mxu0
        %v2823 = vadd.f32 %v2675, %v2822
        %2824 = vmatprep.mubr.f32.mxu0 0.0
        %2825 = vmatmul.mubr.f32.gmra.mrb[0].mxu0 %v2633
        %v2826 = vpop.f32.mrb[0].mxu0
        %v2827 = vadd.f32 %v2680, %v2826
        %v2828 = vpop.f32.mrb[0].mxu0
        %v2829 = vadd.f32 %v2680, %v2828
        %2830 = vmatprep.mubr.f32.mxu0 0.0
        %2831 = vmatmul.mubr.f32.gmra.mrb[0].mxu0 %v2634
        %v2832 = vpop.f32.mrb[0].mxu0
        %v2833 = vadd.f32 %v2685, %v2832
        %v2834 = vpop.f32.mrb[0].mxu0
        %v2835 = vadd.f32 %v2685, %v2834
        %2836 = vmatprep.mubr.f32.mxu0 0.0
        %2837 = vmatmul.mubr.f32.gmra.mrb[0].mxu0 %v2635
        %v2838 = vpop.f32.mrb[0].mxu0
        %v2839 = vadd.f32 %v2690, %v2838
        %v2840 = vpop.f32.mrb[0].mxu0
        %v2841 = vadd.f32 %v2690, %v2840
        %2842 = vmatprep.mubr.f32.mxu0 0.0
        %2843 = vmatmul.mubr.f32.gmra.mrb[0].mxu0 %v2636
        %v2844 = vpop.f32.mrb[0].mxu0
        %v2845 = vadd.f32 %v2695, %v2844
        %v2846 = vpop.f32.mrb[0].mxu0
        %v2847 = vadd.f32 %v2695, %v2846
        %2848 = vmatprep.mubr.f32.mxu0 0.0
        %2849 = vmatmul.mubr.f32.gmra.mrb[0].mxu0 %v2637
        %v2850 = vpop.f32.mrb[0].mxu0
        %v2851 = vadd.f32 %v2700, %v2850
        %v2852 = vpop.f32.mrb[0].mxu0
        %v2853 = vadd.f32 %v2700, %v2852
        %2854 = vmatprep.mubr.f32.mxu0 0.0
        %2855 = vmatmul.mubr.f32.gmra.mrb[0].mxu0 %v2638
        %v2856 = vpop.f32.mrb[0].mxu0
        %v2857 = vadd.f32 %v2705, %v2856
        %v2858 = vpop.f32.mrb[0].mxu0
        %v2859 = vadd.f32 %v2705, %v2858
        %2860 = vmatprep.mubr.f32.mxu0 0.0
        %2861 = vmatmul.mubr.f32.gmra.mrb[0].mxu0 %v2639
        %v2862 = vpop.f32.mrb[0].mxu0
        %v2863 = vadd.f32 %v2710, %v2862
        %v2864 = vpop.f32.mrb[0].mxu0
        %v2865 = vadd.f32 %v2710, %v2864
        %2866 = vmatprep.mubr.f32.mxu0 0.0
        %2867 = vmatmul.mubr.f32.gmra.mrb[0].mxu0 %v2640
        %v2868 = vpop.f32.mrb[0].mxu0
        %v2869 = vadd.f32 %v2715, %v2868
        %v2870 = vpop.f32.mrb[0].mxu0
        %v2871 = vadd.f32 %v2715, %v2870
        %2872 = vmatprep.mubr.f32.mxu0 0.0
        %2873 = vmatmul.mubr.f32.gmra.mrb[0].mxu0 %v2641
        %v2874 = vpop.f32.mrb[0].mxu0
        %v2875 = vadd.f32 %v2720, %v2874
        %v2876 = vpop.f32.mrb[0].mxu0
        %v2877 = vadd.f32 %v2720, %v2876
        %2878 = vmatprep.mubr.f32.mxu0 0.0
        %2879 = vmatmul.mubr.f32.gmra.mrb[0].mxu0 %v2642
        %v2880 = vpop.f32.mrb[0].mxu0
        %v2881 = vadd.f32 %v2725, %v2880
        %v2882 = vpop.f32.mrb[0].mxu0
        %v2883 = vadd.f32 %v2725, %v2882
        %2884 = vmatprep.mubr.f32.mxu0 0.0
        %2885 = vmatmul.mubr.f32.gmra.mrb[0].mxu0 %v2643
        %v2886 = vpop.f32.mrb[0].mxu0
        %v2887 = vadd.f32 %v2730, %v2886
        %v2888 = vpop.f32.mrb[0].mxu0
        %v2889 = vadd.f32 %v2730, %v2888
        %2890 = vmatprep.mubr.f32.mxu0 0.0
        %2891 = vmatmul.mubr.f32.gmra.mrb[0].mxu0 %v2644
        %v2892 = vpop.f32.mrb[0].mxu0
        %v2893 = vadd.f32 %v2735, %v2892
        %v2894 = vpop.f32.mrb[0].mxu0
        %v2895 = vadd.f32 %v2735, %v2894
        %2896 = vmatprep.mubr.f32.mxu0 0.0
        %2897 = vmatmul.mubr.f32.gmra.mrb[0].mxu0 %v2645
        %v2898 = vpop.f32.mrb[0].mxu0
        %v2899 = vadd.f32 %v2740, %v2898
        %v2900 = vpop.f32.mrb[0].mxu0
        %v2901 = vadd.f32 %v2740, %v2900
        %2902 = vdwg.mxu0
        %v2903 = vtanh.pop %v2809
        %v2904 = vtanh.pop %v2811
        %v2905 = vtanh.pop %v2815
        %v2906 = vtanh.pop %v2817
        %v2907 = vtanh.pop %v2821
        %v2908 = vtanh.pop %v2823
        %v2909 = vtanh.pop %v2827
        %v2910 = vtanh.pop %v2829
        %v2911 = vtanh.pop %v2833
        %v2912 = vtanh.pop %v2835
        %v2913 = vtanh.pop %v2839
        %v2914 = vtanh.pop %v2841
        %v2915 = vtanh.pop %v2845
        %v2916 = vtanh.pop %v2847
        %v2917 = vtanh.pop %v2851
        %v2918 = vtanh.pop %v2853
        %v2919 = vtanh.pop %v2857
        %v2920 = vtanh.pop %v2859
        %v2921 = vtanh.pop %v2863
        %v2922 = vtanh.pop %v2865
        %v2923 = vtanh.pop %v2869
        %v2924 = vtanh.pop %v2871
        %v2925 = vtanh.pop %v2875
        %v2926 = vtanh.pop %v2877
        %v2927 = vtanh.pop %v2881
        %v2928 = vtanh.pop %v2883
        %v2929 = vtanh.pop %v2887
        %v2930 = vtanh.pop %v2889
        %v2931 = vtanh.pop %v2893
        %v2932 = vtanh.pop %v2895
        %v2933 = vtanh.pop %v2899
        %v2934 = vtanh.pop %v2901
        %v2935 = vld [vmem:[%s15] sm:$0xff]
        %v2936 = vld [vmem:[%s15 + $0x8] sm:$0xff]
        %v2937 = vld [vmem:[%s15 + $0x10] sm:$0xff]
        %v2938 = vld [vmem:[%s15 + $0x18] sm:$0xff]
        %v2939 = vld [vmem:[%s15 + $0x20] sm:$0xff]
        %v2940 = vld [vmem:[%s15 + $0x28] sm:$0xff]
        %v2941 = vld [vmem:[%s15 + $0x30] sm:$0xff]
        %v2942 = vld [vmem:[%s15 + $0x38] sm:$0xff]
        %v2943 = vld [vmem:[%s15 + $0x40] sm:$0xff]
        %v2944 = vld [vmem:[%s15 + $0x48] sm:$0xff]
        %v2945 = vld [vmem:[%s15 + $0x50] sm:$0xff]
        %v2946 = vld [vmem:[%s15 + $0x58] sm:$0xff]
        %v2947 = vld [vmem:[%s15 + $0x60] sm:$0xff]
        %v2948 = vld [vmem:[%s15 + $0x68] sm:$0xff]
        %v2949 = vld [vmem:[%s15 + $0x70] sm:$0xff]
        %v2950 = vld [vmem:[%s15 + $0x78] sm:$0xff]
        %v2951 = vld [vmem:[#allocation2] sm:$0x1]
        %2953 = vset.pattern.permute.xlu0 0
        %2954 = vperm.xlu0 %2953, %v2935
        %v2955 = vpop.permute.xlu0 %2954
        %2958 = vset.pattern.permute.xlu0 0
        %2959 = vperm.xlu0 %2958, %v2936
        %v2960 = vpop.permute.xlu0 %2959
        %2963 = vset.pattern.permute.xlu0 0
        %2964 = vperm.xlu0 %2963, %v2937
        %v2965 = vpop.permute.xlu0 %2964
        %2968 = vset.pattern.permute.xlu0 0
        %2969 = vperm.xlu0 %2968, %v2938
        %v2970 = vpop.permute.xlu0 %2969
        %2973 = vset.pattern.permute.xlu0 0
        %2974 = vperm.xlu0 %2973, %v2939
        %v2975 = vpop.permute.xlu0 %2974
        %2978 = vset.pattern.permute.xlu0 0
        %2979 = vperm.xlu0 %2978, %v2940
        %v2980 = vpop.permute.xlu0 %2979
        %2983 = vset.pattern.permute.xlu0 0
        %2984 = vperm.xlu0 %2983, %v2941
        %v2985 = vpop.permute.xlu0 %2984
        %2988 = vset.pattern.permute.xlu0 0
        %2989 = vperm.xlu0 %2988, %v2942
        %v2990 = vpop.permute.xlu0 %2989
        %2993 = vset.pattern.permute.xlu0 0
        %2994 = vperm.xlu0 %2993, %v2943
        %v2995 = vpop.permute.xlu0 %2994
        %2998 = vset.pattern.permute.xlu0 0
        %2999 = vperm.xlu0 %2998, %v2944
        %v3000 = vpop.permute.xlu0 %2999
        %3003 = vset.pattern.permute.xlu0 0
        %3004 = vperm.xlu0 %3003, %v2945
        %v3005 = vpop.permute.xlu0 %3004
        %3008 = vset.pattern.permute.xlu0 0
        %3009 = vperm.xlu0 %3008, %v2946
        %v3010 = vpop.permute.xlu0 %3009
        %3013 = vset.pattern.permute.xlu0 0
        %3014 = vperm.xlu0 %3013, %v2947
        %v3015 = vpop.permute.xlu0 %3014
        %3018 = vset.pattern.permute.xlu0 0
        %3019 = vperm.xlu0 %3018, %v2948
        %v3020 = vpop.permute.xlu0 %3019
        %3023 = vset.pattern.permute.xlu0 0
        %3024 = vperm.xlu0 %3023, %v2949
        %v3025 = vpop.permute.xlu0 %3024
        %3028 = vset.pattern.permute.xlu0 0
        %3029 = vperm.xlu0 %3028, %v2950
        %v3030 = vpop.permute.xlu0 %3029
        %v3032 = vmul.f32 %v2903, %v2955
        %v3033 = vmul.f32 %v2904, %v2955
        %v3034 = vmul.f32 %v2905, %v2960
        %v3035 = vmul.f32 %v2906, %v2960
        %v3036 = vmul.f32 %v2907, %v2965
        %v3037 = vmul.f32 %v2908, %v2965
        %v3038 = vmul.f32 %v2909, %v2970
        %v3039 = vmul.f32 %v2910, %v2970
        %v3040 = vmul.f32 %v2911, %v2975
        %v3041 = vmul.f32 %v2912, %v2975
        %v3042 = vmul.f32 %v2913, %v2980
        %v3043 = vmul.f32 %v2914, %v2980
        %v3044 = vmul.f32 %v2915, %v2985
        %v3045 = vmul.f32 %v2916, %v2985
        %v3046 = vmul.f32 %v2917, %v2990
        %v3047 = vmul.f32 %v2918, %v2990
        %v3048 = vmul.f32 %v2919, %v2995
        %v3049 = vmul.f32 %v2920, %v2995
        %v3050 = vmul.f32 %v2921, %v3000
        %v3051 = vmul.f32 %v2922, %v3000
        %v3052 = vmul.f32 %v2923, %v3005
        %v3053 = vmul.f32 %v2924, %v3005
        %v3054 = vmul.f32 %v2925, %v3010
        %v3055 = vmul.f32 %v2926, %v3010
        %v3056 = vmul.f32 %v2927, %v3015
        %v3057 = vmul.f32 %v2928, %v3015
        %v3058 = vmul.f32 %v2929, %v3020
        %v3059 = vmul.f32 %v2930, %v3020
        %v3060 = vmul.f32 %v2931, %v3025
        %v3061 = vmul.f32 %v2932, %v3025
        %v3062 = vmul.f32 %v2933, %v3030
        %v3063 = vmul.f32 %v2934, %v3030
        %v3064 = vadd.f32 %v3032, %v3034
        %v3065 = vadd.f32 %v3064, %v3036
        %v3066 = vadd.f32 %v3065, %v3038
        %v3067 = vadd.f32 %v3066, %v3040
        %v3068 = vadd.f32 %v3067, %v3042
        %v3069 = vadd.f32 %v3068, %v3044
        %v3070 = vadd.f32 %v3069, %v3046
        %v3071 = vadd.f32 %v3070, %v3048
        %v3072 = vadd.f32 %v3071, %v3050
        %v3073 = vadd.f32 %v3072, %v3052
        %v3074 = vadd.f32 %v3073, %v3054
        %v3075 = vadd.f32 %v3074, %v3056
        %v3076 = vadd.f32 %v3075, %v3058
        %v3077 = vadd.f32 %v3076, %v3060
        %v3078 = vadd.f32 %v3077, %v3062
        %v3079 = vrot.slane %v3078, 4
        %v3080 = vadd.f32 %v3078, %v3079
        %v3081 = vrot.slane %v3080, 2
        %v3082 = vadd.f32 %v3080, %v3081
        %v3083 = vrot.slane %v3082, 1
        %v3084 = vadd.f32 %v3082, %v3083
        %v3085 = vadd.f32 %v3033, %v3035
        %v3086 = vadd.f32 %v3085, %v3037
        %v3087 = vadd.f32 %v3086, %v3039
        %v3088 = vadd.f32 %v3087, %v3041
        %v3089 = vadd.f32 %v3088, %v3043
        %v3090 = vadd.f32 %v3089, %v3045
        %v3091 = vadd.f32 %v3090, %v3047
        %v3092 = vadd.f32 %v3091, %v3049
        %v3093 = vadd.f32 %v3092, %v3051
        %v3094 = vadd.f32 %v3093, %v3053
        %v3095 = vadd.f32 %v3094, %v3055
        %v3096 = vadd.f32 %v3095, %v3057
        %v3097 = vadd.f32 %v3096, %v3059
        %v3098 = vadd.f32 %v3097, %v3061
        %v3099 = vadd.f32 %v3098, %v3063
        %v3100 = vrot.slane %v3099, 4
        %v3101 = vadd.f32 %v3099, %v3100
        %v3102 = vrot.slane %v3101, 2
        %v3103 = vadd.f32 %v3101, %v3102
        %v3104 = vrot.slane %v3103, 1
        %v3105 = vadd.f32 %v3103, %v3104
        %3107 = vset.pattern.permute.xlu0 0
        %3108 = vperm.xlu0 %3107, %v2951
        %v3109 = vpop.permute.xlu0 %3108
        %v3111 = vlaneseq
        %v3112 = vshrl.u32 %v3111, 7
        %v3113 = vsub.s32 0, %v3112
        %v3114 = vrot.slane %v3109, %v3113
        %v3115 = vadd.f32 %v3084, %v3114
        %v3116 = vadd.f32 %v3105, %v3114
        %v3119 = vcombine.low %v3115, %v3116
        %v3121 = vunpack.c.l.s4 1966171168
        %v3122 = vunpack.c.0.s8 %v3121
        %v3123 = vlaneseq
        %v3124 = vshrl.u32 %v3123, 7
        %v3125 = vsub.s32 %v3122, %v3124
        %v3126 = vrot.slane %v3119, %v3125
        %v3128 = vunpack.c.l.s4 1966171168
        %v3129 = vunpack.c.0.s8 %v3128
        %v3130 = vlaneseq
        %v3131 = vshrl.u32 %v3130, 7
        %v3132 = vsub.s32 %v3129, %v3131
        %v3133 = vrot.slane %v3126, %v3132
        %v3135 = vlaneseq
        %vm3136 = vcmp.ge.s32.totalorder %v3135, 0
        %vm3137 = vcmp.lt.s32.totalorder %v3135, 256
        %vm3138 = vmand %vm3136, %vm3137
        %3139 = vst.msk [vmem:[%s542] sm:$0x3] %vm3138, %v3133
        %s3140 = sand.u32 %s403, 1
        %s3141 = scalar_lea.sflag [#allocation4], %s3140
        %s3142 = sand.u32 %s403, 1
        %s3143 = smul.addr %s3142, 2
        %s3144 = scalar_lea.vmem [#allocation3], %s3143
        // Predicated region
        $region89: #{tpu_custom_call.1} parent=87 // pred_check
          %p3145 = pneg %p413
        $region90: #{tpu_custom_call.1} parent=87 // pred_check_branch
          %3147 = sbr.rel (%p3145) target = $region92
        $region91: #{tpu_custom_call.1} parent=87 // pred_region
          %s3148 = smul.u32 2, %s33
          %s3150 = ssub.s32 32, 32
          %3151 = vsyncadd %s3141, %s3150
          %s3152 = smul.addr %s3148, 16
          %s3153 = scalar_lea.hbm %s17, %s3152
          %s3155 = sshll.u32 %s3144, 4
          %s3156 = int_to_ptr.vmem [resolvable:$true] %s3155
          %3158 = dma.vmem_to_hbm [thread:$0]  %s3156, 32, %s3153, %s3141
        $region92: #{tpu_custom_call.1} parent=87 // pred_fallthru
          _
      $region88: #{tpu_custom_call.1} parent=5 // pred_fallthru
        _
      %p3159 = scmp.le.s32.totalorder 2, %s28
      // Predicated region
      $region93: #{tpu_custom_call.1} parent=5 // pred_check
        %p3160 = pneg %p3159
      $region94: #{tpu_custom_call.1} parent=5 // pred_check_branch
        %3162 = sbr.rel (%p3160) target = $region96
      $region95: #{tpu_custom_call.1} parent=5 // pred_region
        %s3163 = ssub.s32 %s28, 2
        // Predicated region
        $region97: #{tpu_custom_call.1} parent=95 // pred_check
          %p3164 = pneg %p419
        $region98: #{tpu_custom_call.1} parent=95 // pred_check_branch
          %3166 = sbr.rel (%p3164) target = $region100
        $region99: #{tpu_custom_call.1} parent=95 // pred_region
          %s3167 = sand.u32 %s404, 1
          %s3168 = scalar_lea.sflag [#allocation4], %s3167
          %s3169 = sand.u32 %s404, 1
          %s3170 = smul.addr %s3169, 2
          %s3171 = scalar_lea.vmem [#allocation3], %s3170
          %3172 = dma.done %s3168, 32
        $region100: #{tpu_custom_call.1} parent=95 // pred_fallthru
          _
      $region96: #{tpu_custom_call.1} parent=5 // pred_fallthru
        _
    $region6: #{tpu_custom_call.1} parent=1 // loop_footer
      %s32 = sadd.s32 1, %s28
    $region7: #{tpu_custom_call.1} parent=1 // loop_footer_branch
      %27 = sbr.rel target = $region3
    $region8: #{tpu_custom_call.1} parent=1 // loop_exit
      _
    %3173 = vsyncpa [#allocation4], 1
    %s3174 = scalar_lea.sflag [#allocation4], 1
    %3175 = vsyncpa %s3174, 1

</llo_original>
